<compile_context>
chip_gen: v5e
topology: v5e:2x2
jax: 0.10.0
libtpu: 0.0.40
codegen_flags: <defaults>
</compile_context>

<pallas_src>
import functools

import jax
import jax.numpy as jnp
from jax.experimental import pallas as pl
from jax.experimental.pallas import tpu as pltpu

_BF16 = jnp.bfloat16


def _vmem_limit_bytes():
    # 3/4 of per-core VMEM, capped at 96 MiB (v7x: 64->48 MiB; v5e/v6e: 128->96 MiB).
    try:
        cap = int(pltpu.get_tpu_info().vmem_capacity_bytes)
    except Exception:
        cap = 64 * 1024 * 1024
    return min((cap * 3) // 4, 96 * 1024 * 1024)


_VMEM_LIMIT = _vmem_limit_bytes()


# ----------------------------------------------------------------------------
# Kernel 1: fully fused stride-1 bottleneck
#   conv1(1x1)+BN+ReLU -> conv2(3x3 s1 p1, 9 taps in VMEM)+BN+ReLU
#   -> conv3(1x1)+BN + residual (identity or in-kernel shortcut matmul) + ReLU
# ----------------------------------------------------------------------------
def _bottleneck_s1_kernel(x_ref, w1_ref, b1_ref, w9_ref, b2_ref, w3_ref, b3_ref,
                          *rest, H, W, has_sc):
    if has_sc:
        scw_ref, scb_ref, o_ref, pad_ref = rest
    else:
        o_ref, pad_ref = rest
    HW = H * W
    lead = ((W + 1 + 7) // 8) * 8          # zero-pad rows before the image (aligned)
    R = HW + 2 * lead
    P = w1_ref.shape[-1]

    x = x_ref[0]                            # (HW, Cin) bf16

    # ---- conv1 (1x1) + folded-BN bias + ReLU -> H-zero-padded VMEM scratch ----
    h1 = jnp.dot(x, w1_ref[...], preferred_element_type=jnp.float32) + b1_ref[...]
    h1 = jnp.maximum(h1, 0.0).astype(pad_ref.dtype)
    # Borders are re-zeroed every grid step so the pattern stays correct when the
    # grid axis is split across TensorCores (cheap: 2*lead rows).
    zrow = jnp.zeros((lead, P), pad_ref.dtype)
    pad_ref[0:lead, :] = zrow
    pad_ref[lead + HW:R, :] = zrow
    pad_ref[lead:lead + HW, :] = h1

    # ---- conv2 (3x3, stride 1, pad 1): 9 shifted contiguous row-slices ----
    # Flat layout "wraps" the missing left/right zero padding into the neighbouring
    # image row, so dw==0 taps are masked at output column 0 and dw==2 at W-1.
    col = jax.lax.broadcasted_iota(jnp.int32, (HW, 1), 0) % W
    lmask = (col != 0).astype(pad_ref.dtype)
    rmask = (col != (W - 1)).astype(pad_ref.dtype)
    acc = jnp.zeros((HW, P), jnp.float32)
    for dh in range(3):
        for dw in range(3):
            start = lead + (dh - 1) * W + (dw - 1)
            xs = pad_ref[start:start + HW, :]
            if dw == 0:
                xs = xs * lmask
            elif dw == 2:
                xs = xs * rmask
            acc = acc + jnp.dot(xs, w9_ref[dh * 3 + dw],
                                preferred_element_type=jnp.float32)
    h2 = jnp.maximum(acc + b2_ref[...], 0.0).astype(x.dtype)

    # ---- conv3 (1x1) + bias + residual (+ fused shortcut matmul) + ReLU ----
    out = jnp.dot(h2, w3_ref[...], preferred_element_type=jnp.float32) + b3_ref[...]
    if has_sc:
        out = out + jnp.dot(x, scw_ref[...], preferred_element_type=jnp.float32)
        out = out + scb_ref[...]
    else:
        out = out + x.astype(jnp.float32)
    o_ref[0] = jnp.maximum(out, 0.0).astype(o_ref.dtype)


@jax.jit
def bottleneck_s1(x, w1, b1, w9, b2, w3, b3, sc_w=None, sc_b=None):
    """Fully fused stride-1 bottleneck.  x:(N,H,W,Cin) bf16 -> (N,H,W,Cout) bf16."""
    N, H, W, Cin = x.shape
    P = w1.shape[-1]
    Cout = w3.shape[-1]
    HW = H * W
    lead = ((W + 1 + 7) // 8) * 8
    R = HW + 2 * lead
    has_sc = sc_w is not None

    in_specs = [
        pl.BlockSpec((1, HW, Cin), lambda n: (n, 0, 0)),     # block input (per image)
        pl.BlockSpec((Cin, P), lambda n: (0, 0)),            # conv1 w (resident)
        pl.BlockSpec((1, P), lambda n: (0, 0)),
        pl.BlockSpec((9, P, P), lambda n: (0, 0, 0)),        # conv2 tap weights
        pl.BlockSpec((1, P), lambda n: (0, 0)),
        pl.BlockSpec((P, Cout), lambda n: (0, 0)),           # conv3 w
        pl.BlockSpec((1, Cout), lambda n: (0, 0)),
    ]
    args = [x.reshape(N, HW, Cin).astype(_BF16), w1, b1, w9, b2, w3, b3]
    if has_sc:
        in_specs += [pl.BlockSpec((Cin, Cout), lambda n: (0, 0)),
                     pl.BlockSpec((1, Cout), lambda n: (0, 0))]
        args += [sc_w, sc_b]

    out = pl.pallas_call(
        functools.partial(_bottleneck_s1_kernel, H=H, W=W, has_sc=has_sc),
        out_shape=jax.ShapeDtypeStruct((N, HW, Cout), _BF16),
        grid=(N,),
        in_specs=in_specs,
        out_specs=pl.BlockSpec((1, HW, Cout), lambda n: (n, 0, 0)),
        scratch_shapes=[pltpu.VMEM((R, P), _BF16)],
        compiler_params=pltpu.CompilerParams(
            dimension_semantics=("parallel",),
            vmem_limit_bytes=_VMEM_LIMIT,
        ),
    )(*args)
    return out.reshape(N, H, W, Cout)


# ----------------------------------------------------------------------------
# Kernel 2: fused matmul + (folded-BN) bias (+ fused shortcut matmul) (+ ReLU)
#   used for the stem and the three stride-2 blocks (im2col'd conv2)
# ----------------------------------------------------------------------------
def _mm_plain_kernel(x_ref, w_ref, b_ref, o_ref, *, relu):
    acc = jnp.dot(x_ref[...], w_ref[...], preferred_element_type=jnp.float32)
    acc = acc + b_ref[...]
    if relu:
        acc = jnp.maximum(acc, 0.0)
    o_ref[...] = acc.astype(o_ref.dtype)


def _mm_shortcut_kernel(x_ref, w_ref, b_ref, xr_ref, wr_ref, br_ref, o_ref, *, relu):
    acc = jnp.dot(x_ref[...], w_ref[...], preferred_element_type=jnp.float32)
    acc = acc + b_ref[...]
    acc = acc + jnp.dot(xr_ref[...], wr_ref[...], preferred_element_type=jnp.float32)
    acc = acc + br_ref[...]
    if relu:
        acc = jnp.maximum(acc, 0.0)
    o_ref[...] = acc.astype(o_ref.dtype)


def _pick_tile(m):
    # Keep >= 2 grid steps (v7x megacore) whenever the per-step M stays >= 128.
    cap = m // 2 if m >= 256 else m
    for t in (1024, 512, 256, 128):
        if t <= cap and m % t == 0:
            return t
    return m


@functools.partial(jax.jit, static_argnames=("relu",))
def fused_matmul(x, w, bias, *, relu):
    """out = act(x @ w + bias);  x:(M,K) bf16, w:(K,N) bf16, bias:(1,N) f32."""
    x = x.astype(_BF16)
    w = w.astype(_BF16)
    bias = bias.astype(jnp.float32)
    M, K = x.shape
    _, N = w.shape
    tm = _pick_tile(M)
    return pl.pallas_call(
        functools.partial(_mm_plain_kernel, relu=relu),
        out_shape=jax.ShapeDtypeStruct((M, N), _BF16),
        grid=(M // tm,),
        in_specs=[pl.BlockSpec((tm, K), lambda i: (i, 0)),
                  pl.BlockSpec((K, N), lambda i: (0, 0)),
                  pl.BlockSpec((1, N), lambda i: (0, 0))],
        out_specs=pl.BlockSpec((tm, N), lambda i: (i, 0)),
        compiler_params=pltpu.CompilerParams(
            dimension_semantics=("parallel",),
            vmem_limit_bytes=_VMEM_LIMIT,
        ),
    )(x, w, bias)


@functools.partial(jax.jit, static_argnames=("relu",))
def fused_matmul_sc(x, w, bias, xr, wr, biasr, *, relu):
    """out = act(x @ w + bias + xr @ wr + biasr)  (conv3 + downsample shortcut)."""
    x = x.astype(_BF16)
    w = w.astype(_BF16)
    bias = bias.astype(jnp.float32)
    xr = xr.astype(_BF16)
    wr = wr.astype(_BF16)
    biasr = biasr.astype(jnp.float32)
    M, K = x.shape
    _, N = w.shape
    Kr = xr.shape[-1]
    tm = _pick_tile(M)
    return pl.pallas_call(
        functools.partial(_mm_shortcut_kernel, relu=relu),
        out_shape=jax.ShapeDtypeStruct((M, N), _BF16),
        grid=(M // tm,),
        in_specs=[pl.BlockSpec((tm, K), lambda i: (i, 0)),
                  pl.BlockSpec((K, N), lambda i: (0, 0)),
                  pl.BlockSpec((1, N), lambda i: (0, 0)),
                  pl.BlockSpec((tm, Kr), lambda i: (i, 0)),
                  pl.BlockSpec((Kr, N), lambda i: (0, 0)),
                  pl.BlockSpec((1, N), lambda i: (0, 0))],
        out_specs=pl.BlockSpec((tm, N), lambda i: (i, 0)),
        compiler_params=pltpu.CompilerParams(
            dimension_semantics=("parallel",),
            vmem_limit_bytes=_VMEM_LIMIT,
        ),
    )(x, w, bias, xr, wr, biasr)


# ----------------------------------------------------------------------------
# Kernel 3: fused 4x4 average pool + Linear head (classes padded to 128 lanes)
# ----------------------------------------------------------------------------
def _pool_linear_kernel(x_ref, w_ref, b_ref, o_ref):
    pooled = jnp.mean(x_ref[...].astype(jnp.float32), axis=1)   # == avg_pool2d(4)
    o_ref[...] = jnp.dot(pooled.astype(_BF16), w_ref[...],
                         preferred_element_type=jnp.float32) + b_ref[...]


@jax.jit
def pool_linear(x, w, b):
    """x:(B,P,C) bf16 -> mean over P -> @ w(C,128) + b(1,128), f32 logits."""
    B, P, C = x.shape
    _, NC = w.shape
    return pl.pallas_call(
        _pool_linear_kernel,
        out_shape=jax.ShapeDtypeStruct((B, NC), jnp.float32),
        grid=(1,),
        in_specs=[pl.BlockSpec((B, P, C), lambda i: (0, 0, 0)),
                  pl.BlockSpec((C, NC), lambda i: (0, 0)),
                  pl.BlockSpec((1, NC), lambda i: (0, 0))],
        out_specs=pl.BlockSpec((B, NC), lambda i: (0, 0)),
        compiler_params=pltpu.CompilerParams(
            dimension_semantics=("arbitrary",),
            vmem_limit_bytes=_VMEM_LIMIT,
        ),
    )(x.astype(_BF16), w.astype(_BF16), b.astype(jnp.float32))


# ----------------------------------------------------------------------------
# Glue: im2col patch extraction (stem and the 3 stride-2 convs only)
# ----------------------------------------------------------------------------
def im2col_3x3(x, stride):
    """x:(N,H,W,C) NHWC, 3x3 kernel, pad=1 -> ((N*Ho*Wo, 9*C), (N,Ho,Wo))."""
    N, H, W, C = x.shape
    Ho = (H + 2 - 3) // stride + 1
    Wo = (W + 2 - 3) // stride + 1
    xp = jnp.pad(x, ((0, 0), (1, 1), (1, 1), (0, 0)))
    cols = []
    for dh in range(3):
        for dw in range(3):
            cols.append(xp[:, dh:dh + stride * Ho:stride,
                           dw:dw + stride * Wo:stride, :])
    patches = jnp.concatenate(cols, axis=-1)                  # (N,Ho,Wo,9*C)
    return patches.reshape(N * Ho * Wo, 9 * C), (N, Ho, Wo)


# ----------------------------------------------------------------------------
# Deterministic parameter init (BN folded, plane dims zero-padded to >= 128)
# ----------------------------------------------------------------------------
def _he(key, shape, fan_in):
    return jax.random.normal(key, shape, jnp.float32) * (2.0 / fan_in) ** 0.5


def _fold_bn(w, c, eps=1e-5):
    """Fold eval-mode BatchNorm (PyTorch defaults) into (bf16 weight, f32 bias)."""
    gamma = jnp.ones((c,), jnp.float32)
    beta = jnp.zeros((c,), jnp.float32)
    mean = jnp.zeros((c,), jnp.float32)
    var = jnp.ones((c,), jnp.float32)
    scale = gamma / jnp.sqrt(var + eps)
    bias = (beta - mean * scale).reshape(1, c)
    return (w * scale).astype(_BF16), bias


def init_bottleneck(key, in_dim, planes, stride):
    p_pad = max(planes, 128)          # lane-dense internal planes dim
    out_dim = 4 * planes              # always >= 256
    k1, k2, k3, k4 = jax.random.split(key, 4)

    w1 = jnp.zeros((in_dim, p_pad), jnp.float32)
    w1 = w1.at[:, :planes].set(_he(k1, (in_dim, planes), in_dim))
    w1, b1 = _fold_bn(w1, p_pad)

    w2 = jnp.zeros((9, p_pad, p_pad), jnp.float32)
    w2 = w2.at[:, :planes, :planes].set(_he(k2, (9, planes, planes), 9 * planes))
    w2, b2 = _fold_bn(w2, p_pad)

    w3 = jnp.zeros((p_pad, out_dim), jnp.float32)
    w3 = w3.at[:planes, :].set(_he(k3, (planes, out_dim), planes))
    w3, b3 = _fold_bn(w3, out_dim)

    p = {"stride": stride,
         "conv1_w": w1, "bn1_b": b1,
         "conv2_w": w2, "bn2_b": b2,
         "conv3_w": w3, "bn3_b": b3}
    if stride != 1 or in_dim != out_dim:
        sw, sb = _fold_bn(_he(k4, (in_dim, out_dim), in_dim), out_dim)
        p["sc_w"], p["sc_bn_b"] = sw, sb
    return p


_NC_PAD = 128   # lane-dense classifier output; sliced back to num_classes outside


def init_resnet101_params(key, num_classes=10):
    assert num_classes <= _NC_PAD
    num_blocks = [3, 4, 23, 3]
    planes_list = [64, 128, 256, 512]
    strides0 = [1, 2, 2, 2]

    params = {"num_classes": num_classes}
    key, k = jax.random.split(key)
    # stem 3x3 conv, HWIO flattened (K=27); 64 real output channels padded to 128
    w = jnp.zeros((27, 128), jnp.float32).at[:, :64].set(_he(k, (27, 64), 27))
    params["conv1_w"], params["bn1_b"] = _fold_bn(w, 128)

    in_dim = 128   # stem output: 64 real + 64 zero-padded channels
    for li, (planes, nb, s0) in enumerate(zip(planes_list, num_blocks, strides0), 1):
        blocks = []
        for st in [s0] + [1] * (nb - 1):
            key, k = jax.random.split(key)
            blocks.append(init_bottleneck(k, in_dim, planes, st))
            in_dim = 4 * planes
        params[f"layer{li}"] = blocks

    key, kw_, kb_ = jax.random.split(key, 3)
    fan_in = 512 * 4
    bound = 1.0 / fan_in ** 0.5
    lw = jax.random.uniform(kw_, (fan_in, num_classes), jnp.float32, -bound, bound)
    lb = jax.random.uniform(kb_, (num_classes,), jnp.float32, -bound, bound)
    params["linear_w"] = (jnp.zeros((fan_in, _NC_PAD), jnp.float32)
                          .at[:, :num_classes].set(lw)).astype(_BF16)
    params["linear_b"] = (jnp.zeros((1, _NC_PAD), jnp.float32)
                          .at[0, :num_classes].set(lb))
    return params


# ----------------------------------------------------------------------------
# Forward pass
# ----------------------------------------------------------------------------
def bottleneck_forward(p, x):
    """x: (N, H, W, Cin) NHWC bf16 -> (N, Ho, Wo, 4*planes) bf16."""
    N, H, W, C = x.shape
    stride = p["stride"]

    if stride == 1:
        # one fused pallas_call: conv1 -> 3x3 -> conv3 + residual/shortcut + relu
        return bottleneck_s1(x, p["conv1_w"], p["bn1_b"], p["conv2_w"], p["bn2_b"],
                             p["conv3_w"], p["bn3_b"],
                             p.get("sc_w"), p.get("sc_bn_b"))

    # stride-2 downsampling block: conv1 / im2col conv2 / conv3 + fused shortcut
    p_pad = p["conv1_w"].shape[-1]
    out_dim = p["conv3_w"].shape[-1]
    h = fused_matmul(x.reshape(N * H * W, C), p["conv1_w"], p["bn1_b"], relu=True)
    h = h.reshape(N, H, W, p_pad)
    patches, (_, Ho, Wo) = im2col_3x3(h, stride)
    h = fused_matmul(patches, p["conv2_w"].reshape(9 * p_pad, p_pad),
                     p["bn2_b"], relu=True)
    xs = x[:, ::stride, ::stride, :].reshape(N * Ho * Wo, C)
    out = fused_matmul_sc(h, p["conv3_w"], p["bn3_b"],
                          xs, p["sc_w"], p["sc_bn_b"], relu=True)
    return out.reshape(N, Ho, Wo, out_dim)


def resnet101_forward(params, x_nchw):
    x = jnp.transpose(x_nchw, (0, 2, 3, 1)).astype(_BF16)   # NCHW -> NHWC, bf16
    N = x.shape[0]

    # stem: conv 3x3 s1 p1 (Cin=3 -> tiny im2col, K=27) + bn + relu, 128 lanes out
    patches, (_, Ho, Wo) = im2col_3x3(x, 1)
    out = fused_matmul(patches, params["conv1_w"], params["bn1_b"], relu=True)
    out = out.reshape(N, Ho, Wo, params["conv1_w"].shape[-1])

    for lname in ("layer1", "layer2", "layer3", "layer4"):
        for bp in params[lname]:
            out = bottleneck_forward(bp, out)

    N2, H2, W2, C2 = out.shape
    assert H2 == 4 and W2 == 4 and C2 == 2048, (N2, H2, W2, C2)
    # F.avg_pool2d(out, 4) -> view -> linear, fused; classes padded to 128 lanes
    logits = pool_linear(out.reshape(N2, H2 * W2, C2),
                         params["linear_w"], params["linear_b"])
    return logits[:, :params["num_classes"]]


# ----------------------------------------------------------------------------
if __name__ == "__main__":
    key = jax.random.PRNGKey(0)
    pkey, xkey = jax.random.split(key)

    params = init_resnet101_params(pkey, num_classes=10)
    # CIFAR-style input (NCHW like PyTorch); spatial 32 is required so the final
    # avg_pool2d(4) sees a 4x4 feature map, batch kept small.
    x = jax.random.normal(xkey, (2, 3, 32, 32), jnp.float32)

    logits = resnet101_forward(params, x)
    logits = jax.block_until_ready(logits)

    assert logits.shape == (2, 10), logits.shape
    assert bool(jnp.all(jnp.isfinite(logits)))
    print("KERNEL_OK")
</pallas_src>

<mosaic_0001>
module attributes {stable_mosaic.version = 11 : i64} {
  func.func @_mm_plain_kernel(%arg0: i32, %arg1: memref<1024x27xbf16, #tpu.memory_space<vmem>>, %arg2: memref<27x128xbf16, #tpu.memory_space<vmem>>, %arg3: memref<1x128xf32, #tpu.memory_space<vmem>>, %arg4: memref<1024x128xbf16, #tpu.memory_space<vmem>>) attributes {dimension_semantics = [#tpu.dimension_semantics<parallel>], iteration_bounds = array<i64: 2>, scalar_prefetch = 0 : i64, scratch_operands = 0 : i64, tpu.core_type = #tpu.core_type<tc>, window_params = [{transform_indices = @transform_0, window_bounds = array<i64: 1024, 27>}, {pipeline_mode = #tpu.pipeline_mode<synchronous>, transform_indices = @transform_1, window_bounds = array<i64: 27, 128>}, {pipeline_mode = #tpu.pipeline_mode<synchronous>, transform_indices = @transform_2, window_bounds = array<i64: 1, 128>}, {transform_indices = @transform_3, window_bounds = array<i64: 1024, 128>}]} {
    %c0 = arith.constant 0 : index
    %c0_0 = arith.constant 0 : index
    %0 = vector.load %arg1[%c0, %c0_0] : memref<1024x27xbf16, #tpu.memory_space<vmem>>, vector<1024x27xbf16>
    %c0_1 = arith.constant 0 : index
    %c0_2 = arith.constant 0 : index
    %1 = vector.load %arg2[%c0_1, %c0_2] : memref<27x128xbf16, #tpu.memory_space<vmem>>, vector<27x128xbf16>
    %cst = arith.constant dense<0.000000e+00> : vector<1024x128xf32>
    %2 = tpu.matmul %0, %1, %cst {dimension_numbers = #tpu.dot_dimension_numbers<[1], [0], [0], [1], [0, 0, 1, 1], [], []>} : vector<1024x27xbf16>, vector<27x128xbf16>, vector<1024x128xf32> -> vector<1024x128xf32>
    %c0_3 = arith.constant 0 : index
    %c0_4 = arith.constant 0 : index
    %3 = vector.load %arg3[%c0_3, %c0_4] : memref<1x128xf32, #tpu.memory_space<vmem>>, vector<1x128xf32>
    %4 = vector.broadcast %3 : vector<1x128xf32> to vector<1024x128xf32>
    %5 = arith.addf %2, %4 : vector<1024x128xf32>
    %cst_5 = arith.constant 0.000000e+00 : f32
    %6 = vector.broadcast %cst_5 : f32 to vector<1024x128xf32>
    %7 = arith.maximumf %5, %6 : vector<1024x128xf32>
    %8 = arith.truncf %7 : vector<1024x128xf32> to vector<1024x128xbf16>
    %c0_6 = arith.constant 0 : index
    %c0_7 = arith.constant 0 : index
    %9 = vector.load %arg4[%c0_6, %c0_7] : memref<1024x128xbf16, #tpu.memory_space<vmem>>, vector<1024x128xbf16>
    tpu.vector_store %arg4[%c0_6, %c0_7], %8 {strides = array<i32>} : memref<1024x128xbf16, #tpu.memory_space<vmem>>, vector<1024x128xbf16>,
    return
  }
  func.func @transform_0(%arg0: i32) -> (i32, i32) {
    %c0_i32 = arith.constant 0 : i32
    %c0_i32_0 = arith.constant 0 : i32
    return %arg0, %c0_i32 : i32, i32
  }
  func.func @transform_1(%arg0: i32) -> (i32, i32) {
    %c0_i32 = arith.constant 0 : i32
    %c0_i32_0 = arith.constant 0 : i32
    %c0_i32_1 = arith.constant 0 : i32
    return %c0_i32, %c0_i32_0 : i32, i32
  }
  func.func @transform_2(%arg0: i32) -> (i32, i32) {
    %c0_i32 = arith.constant 0 : i32
    %c0_i32_0 = arith.constant 0 : i32
    %c0_i32_1 = arith.constant 0 : i32
    return %c0_i32, %c0_i32_0 : i32, i32
  }
  func.func @transform_3(%arg0: i32) -> (i32, i32) {
    %c0_i32 = arith.constant 0 : i32
    %c0_i32_0 = arith.constant 0 : i32
    return %arg0, %c0_i32 : i32, i32
  }
}

</mosaic_0001>

<llo_original>
// kernel: fused_matmul.1
$region0: #{fused_matmul.1}
  #allocation0 [shape = 'u32[]', space=smem, size = 0x4, offset = 0x4, fixed_abs, tag = 'smem constant byte address 0x4 - core index']
  #allocation1 [shape = 'u32[72,128]{1,0:T(1,128)}', space=vmem, size = 0x9000, scoped, tag = 'internal scratch']
  %s0 = inlined_call_operand.vmem [shape: bf16[2048,27], index: 0, kind: input, shape index: {}]
  %s1 = inlined_call_operand.vmem [shape: bf16[27,128], index: 1, kind: input, shape index: {}]
  %s2 = inlined_call_operand.vmem [shape: f32[1,128], index: 2, kind: input, shape index: {}]
  %s3 = inlined_call_operand.hbm [shape: bf16[2048,128], index: 3, kind: output, shape index: {}]
  %s4 = sld [smem:[#allocation0]]
  $region45: #{fused_matmul.1} parent=0
    _
  %s6 = ssub.s32 1, %s4
  %s7 = scalar_select 0, %s6, %s4
  $region1: #{fused_matmul.1} parent=0
    #allocation2 [shape = 'u8[524288]{0}', space=vmem, size = 0x80000, scoped, tag = 'output window, operand 0']
    #allocation3 [shape = 's32[2]{0}', space=sflag, size = 0x8, scoped, tag = 'scoped memory for fused_matmul.1']
    %8 = vsyncpa [#allocation3], 0
    %s9 = scalar_lea.sflag [#allocation3], 1
    %10 = vsyncpa %s9, 0
    loop: start=0, step=1, limit=4
    $region2: #{fused_matmul.1} parent=1 // loop_pre_header
      _
    $region3: #{fused_matmul.1} parent=1 // loop_header
      %s12 = sphi 0, %s16
      %p13 = scmp.ge.s32.totalorder %s12, 4
      %s22 = sphi 0, %s24
      %s25 = sphi 0, %s22
      %s26 = sphi 0, %s25
      %s42 = sphi 0, %s26
      %s46 = sphi 0, %s46
      %s48 = sphi 0, %s46
      %s49 = sphi 0, %s48
      %s63 = sphi 0, %s49
      %s67 = sphi 0, %s67
      %s69 = sphi 0, %s67
      %s70 = sphi 0, %s69
      %s84 = sphi 0, %s70
      %s90 = sphi 0, %s92
      %s93 = sphi 0, %s90
      %s94 = sphi 0, %s93
      %s110 = sphi 0, %s94
    $region4: #{fused_matmul.1} parent=1 // loop_header_branch
      %15 = sbr.rel (%p13) target = $region8
    $region5: #{fused_matmul.1} parent=1 // loop_body
      %s17 = ssub.s32 %s12, 1
      %s18 = ssub.s32 %s12, 2
      %s19 = sadd.s32 %s12, 1
      %s20 = ssub.s32 %s12, %s19
      %p21 = scmp.eq.s32.totalorder %s20, 0
      %s23 = sadd.s32 %s22, 1
      %s24 = scalar_select %p21, %s22, %s23
      %p27 = pneg %p21
      %p28 = scmp.eq.s32.totalorder %s12, 1
      %p29 = por %p27, %p28
      %p30 = scmp.ne.s32.totalorder %s22, %s25
      %p31 = scmp.eq.s32.totalorder %s12, 0
      %p32 = por %p30, %p31
      %p33 = scmp.ne.s32.totalorder %s22, %s25
      %p34 = scmp.eq.s32.totalorder %s17, 1
      %p35 = por %p33, %p34
      %p36 = scmp.ne.s32.totalorder %s25, %s26
      %p37 = scmp.eq.s32.totalorder %s17, 0
      %p38 = por %p36, %p37
      %p39 = scmp.ne.s32.totalorder %s25, %s26
      %p40 = scmp.eq.s32.totalorder %s18, 1
      %p41 = por %p39, %p40
      %p43 = scmp.ne.s32.totalorder %s26, %s42
      %p44 = scmp.eq.s32.totalorder %s18, 0
      %p45 = por %p43, %p44
      %s47 = sadd.s32 %s46, 1
      %p50 = scmp.eq.s32.totalorder %s12, 1
      %p51 = scmp.ne.s32.totalorder %s46, %s48
      %p52 = scmp.eq.s32.totalorder %s12, 0
      %p53 = por %p51, %p52
      %p54 = scmp.ne.s32.totalorder %s46, %s48
      %p55 = scmp.eq.s32.totalorder %s17, 1
      %p56 = por %p54, %p55
      %p57 = scmp.ne.s32.totalorder %s48, %s49
      %p58 = scmp.eq.s32.totalorder %s17, 0
      %p59 = por %p57, %p58
      %p60 = scmp.ne.s32.totalorder %s48, %s49
      %p61 = scmp.eq.s32.totalorder %s18, 1
      %p62 = por %p60, %p61
      %p64 = scmp.ne.s32.totalorder %s49, %s63
      %p65 = scmp.eq.s32.totalorder %s18, 0
      %p66 = por %p64, %p65
      %s68 = sadd.s32 %s67, 1
      %p71 = scmp.eq.s32.totalorder %s12, 1
      %p72 = scmp.ne.s32.totalorder %s67, %s69
      %p73 = scmp.eq.s32.totalorder %s12, 0
      %p74 = por %p72, %p73
      %p75 = scmp.ne.s32.totalorder %s67, %s69
      %p76 = scmp.eq.s32.totalorder %s17, 1
      %p77 = por %p75, %p76
      %p78 = scmp.ne.s32.totalorder %s69, %s70
      %p79 = scmp.eq.s32.totalorder %s17, 0
      %p80 = por %p78, %p79
      %p81 = scmp.ne.s32.totalorder %s69, %s70
      %p82 = scmp.eq.s32.totalorder %s18, 1
      %p83 = por %p81, %p82
      %p85 = scmp.ne.s32.totalorder %s70, %s84
      %p86 = scmp.eq.s32.totalorder %s18, 0
      %p87 = por %p85, %p86
      %s88 = ssub.s32 %s12, %s19
      %p89 = scmp.eq.s32.totalorder %s88, 0
      %s91 = sadd.s32 %s90, 1
      %s92 = scalar_select %p89, %s90, %s91
      %p95 = pneg %p89
      %p96 = scmp.eq.s32.totalorder %s12, 1
      %p97 = por %p95, %p96
      %p98 = scmp.ne.s32.totalorder %s90, %s93
      %p99 = scmp.eq.s32.totalorder %s12, 0
      %p100 = por %p98, %p99
      %p101 = scmp.ne.s32.totalorder %s90, %s93
      %p102 = scmp.eq.s32.totalorder %s17, 1
      %p103 = por %p101, %p102
      %p104 = scmp.ne.s32.totalorder %s93, %s94
      %p105 = scmp.eq.s32.totalorder %s17, 0
      %p106 = por %p104, %p105
      %p107 = scmp.ne.s32.totalorder %s93, %s94
      %p108 = scmp.eq.s32.totalorder %s18, 1
      %p109 = por %p107, %p108
      %p111 = scmp.ne.s32.totalorder %s94, %s110
      %p112 = scmp.eq.s32.totalorder %s18, 0
      %p113 = por %p111, %p112
      %p114 = scmp.le.s32.totalorder 1, %s12
      %p115 = scmp.lt.s32.totalorder %s12, 3
      %p116 = pnand %p114, %p115
      %p117 = pneg %p116
      // Predicated region
      $region9: #{fused_matmul.1} parent=5 // pred_check
        _
      $region10: #{fused_matmul.1} parent=5 // pred_check_branch
        %119 = sbr.rel (%p116) target = $region12
      $region11: #{fused_matmul.1} parent=5 // pred_region
        %s120 = ssub.s32 %s12, 1
        // Predicated region
        $region13: #{fused_matmul.1} parent=11 // pred_check
          %p121 = pneg %p59
        $region14: #{fused_matmul.1} parent=11 // pred_check_branch
          %123 = sbr.rel (%p121) target = $region16
        $region15: #{fused_matmul.1} parent=11 // pred_region
          _
        $region16: #{fused_matmul.1} parent=11 // pred_fallthru
          _
        // Predicated region
        $region17: #{fused_matmul.1} parent=11 // pred_check
          %p124 = pneg %p80
        $region18: #{fused_matmul.1} parent=11 // pred_check_branch
          %126 = sbr.rel (%p124) target = $region20
        $region19: #{fused_matmul.1} parent=11 // pred_region
          _
        $region20: #{fused_matmul.1} parent=11 // pred_fallthru
          _
      $region12: #{fused_matmul.1} parent=5 // pred_fallthru
        _
      %p127 = scmp.lt.s32.totalorder %s12, 2
      // Predicated region
      $region21: #{fused_matmul.1} parent=5 // pred_check
        %p128 = pneg %p127
      $region22: #{fused_matmul.1} parent=5 // pred_check_branch
        %130 = sbr.rel (%p128) target = $region24
      $region23: #{fused_matmul.1} parent=5 // pred_region
        // Predicated region
        $region25: #{fused_matmul.1} parent=23 // pred_check
          %p131 = pneg %p32
        $region26: #{fused_matmul.1} parent=23 // pred_check_branch
          %133 = sbr.rel (%p131) target = $region28
        $region27: #{fused_matmul.1} parent=23 // pred_region
          %s134 = smul.u32 128, %s12
          %p135 = scmp.lt.s32.totalorder %s134, 255
          %s136 = scalar_select %p135, %s134, 255
          %s137 = smul.addr %s136, 4
          %s138 = scalar_lea.vmem %s0, %s137
          %s139 = smul.u32 128, %s12
        $region28: #{fused_matmul.1} parent=23 // pred_fallthru
          _
      $region24: #{fused_matmul.1} parent=5 // pred_fallthru
        _
      %p140 = scmp.le.s32.totalorder 1, %s12
      %p141 = scmp.lt.s32.totalorder %s12, 3
      %p142 = pnand %p140, %p141
      %p143 = pneg %p142
      // Predicated region
      $region29: #{fused_matmul.1} parent=5 // pred_check
        _
      $region30: #{fused_matmul.1} parent=5 // pred_check_branch
        %145 = sbr.rel (%p142) target = $region32
      $region31: #{fused_matmul.1} parent=5 // pred_region
        %s146 = ssub.s32 %s12, 1
        %s147 = smul.u32 128, %s17
        %p148 = scmp.lt.s32.totalorder %s147, 255
        %s149 = scalar_select %p148, %s147, 255
        %s150 = smul.addr %s149, 4
        %s151 = scalar_lea.vmem %s0, %s150
        %p152 = pneg %p38
        %p153 = pneg %p35
        %p154 = pneg %p59
        %p155 = pneg %p56
        %p156 = pneg %p80
        %p157 = pneg %p77
        %p158 = pneg %p106
        %p159 = pneg %p103
        %s160 = sand.u32 %s93, 1
        %s161 = scalar_lea.sflag [#allocation3], %s160
        %s162 = sand.u32 %s93, 1
        %s163 = smul.addr %s162, 512
        %s164 = scalar_lea.vmem [#allocation2], %s163
        %s165 = smul.u32 128, %s17
        %p166 = scmp.lt.s32.totalorder %s165, 255
        %s167 = scalar_select %p166, %s165, 255
        %s168 = smul.addr %s167, 4
        %s169 = scalar_lea.vmem %s0, %s168
        %s170 = smul.u32 128, %s17
        %s171 = smul.u32 128, %s17
        %v173 = vld [vmem:[%s169] sm:$0xf]
        %v174 = vld [vmem:[%s169 + $0x4] sm:$0xf]
        %v175 = vld [vmem:[%s169 + $0x8] sm:$0xf]
        %v176 = vld [vmem:[%s169 + $0xc] sm:$0xf]
        %v177 = vld [vmem:[%s169 + $0x10] sm:$0xf]
        %v178 = vld [vmem:[%s169 + $0x14] sm:$0xf]
        %v179 = vld [vmem:[%s169 + $0x18] sm:$0xf]
        %v180 = vld [vmem:[%s169 + $0x1c] sm:$0xf]
        %v181 = vld [vmem:[%s169 + $0x20] sm:$0xf]
        %v182 = vld [vmem:[%s169 + $0x24] sm:$0xf]
        %v183 = vld [vmem:[%s169 + $0x28] sm:$0xf]
        %v184 = vld [vmem:[%s169 + $0x2c] sm:$0xf]
        %v185 = vld [vmem:[%s169 + $0x30] sm:$0xf]
        %v186 = vld [vmem:[%s169 + $0x34] sm:$0xf]
        %v187 = vld [vmem:[%s169 + $0x38] sm:$0xf]
        %v188 = vld [vmem:[%s169 + $0x3c] sm:$0xf]
        %v189 = vld [vmem:[%s169 + $0x40] sm:$0xf]
        %v190 = vld [vmem:[%s169 + $0x44] sm:$0xf]
        %v191 = vld [vmem:[%s169 + $0x48] sm:$0xf]
        %v192 = vld [vmem:[%s169 + $0x4c] sm:$0xf]
        %v193 = vld [vmem:[%s169 + $0x50] sm:$0xf]
        %v194 = vld [vmem:[%s169 + $0x54] sm:$0xf]
        %v195 = vld [vmem:[%s169 + $0x58] sm:$0xf]
        %v196 = vld [vmem:[%s169 + $0x5c] sm:$0xf]
        %v197 = vld [vmem:[%s169 + $0x60] sm:$0xf]
        %v198 = vld [vmem:[%s169 + $0x64] sm:$0xf]
        %v199 = vld [vmem:[%s169 + $0x68] sm:$0xf]
        %v200 = vld [vmem:[%s169 + $0x6c] sm:$0xf]
        %v201 = vld [vmem:[%s169 + $0x70] sm:$0xf]
        %v202 = vld [vmem:[%s169 + $0x74] sm:$0xf]
        %v203 = vld [vmem:[%s169 + $0x78] sm:$0xf]
        %v204 = vld [vmem:[%s169 + $0x7c] sm:$0xf]
        %v205 = vld [vmem:[%s169 + $0x80] sm:$0xf]
        %v206 = vld [vmem:[%s169 + $0x84] sm:$0xf]
        %v207 = vld [vmem:[%s169 + $0x88] sm:$0xf]
        %v208 = vld [vmem:[%s169 + $0x8c] sm:$0xf]
        %v209 = vld [vmem:[%s169 + $0x90] sm:$0xf]
        %v210 = vld [vmem:[%s169 + $0x94] sm:$0xf]
        %v211 = vld [vmem:[%s169 + $0x98] sm:$0xf]
        %v212 = vld [vmem:[%s169 + $0x9c] sm:$0xf]
        %v213 = vld [vmem:[%s169 + $0xa0] sm:$0xf]
        %v214 = vld [vmem:[%s169 + $0xa4] sm:$0xf]
        %v215 = vld [vmem:[%s169 + $0xa8] sm:$0xf]
        %v216 = vld [vmem:[%s169 + $0xac] sm:$0xf]
        %v217 = vld [vmem:[%s169 + $0xb0] sm:$0xf]
        %v218 = vld [vmem:[%s169 + $0xb4] sm:$0xf]
        %v219 = vld [vmem:[%s169 + $0xb8] sm:$0xf]
        %v220 = vld [vmem:[%s169 + $0xbc] sm:$0xf]
        %v221 = vld [vmem:[%s169 + $0xc0] sm:$0xf]
        %v222 = vld [vmem:[%s169 + $0xc4] sm:$0xf]
        %v223 = vld [vmem:[%s169 + $0xc8] sm:$0xf]
        %v224 = vld [vmem:[%s169 + $0xcc] sm:$0xf]
        %v225 = vld [vmem:[%s169 + $0xd0] sm:$0xf]
        %v226 = vld [vmem:[%s169 + $0xd4] sm:$0xf]
        %v227 = vld [vmem:[%s169 + $0xd8] sm:$0xf]
        %v228 = vld [vmem:[%s169 + $0xdc] sm:$0xf]
        %v229 = vld [vmem:[%s169 + $0xe0] sm:$0xf]
        %v230 = vld [vmem:[%s169 + $0xe4] sm:$0xf]
        %v231 = vld [vmem:[%s169 + $0xe8] sm:$0xf]
        %v232 = vld [vmem:[%s169 + $0xec] sm:$0xf]
        %v233 = vld [vmem:[%s169 + $0xf0] sm:$0xf]
        %v234 = vld [vmem:[%s169 + $0xf4] sm:$0xf]
        %v235 = vld [vmem:[%s169 + $0xf8] sm:$0xf]
        %v236 = vld [vmem:[%s169 + $0xfc] sm:$0xf]
        %v237 = vld [vmem:[%s169 + $0x100] sm:$0xf]
        %v238 = vld [vmem:[%s169 + $0x104] sm:$0xf]
        %v239 = vld [vmem:[%s169 + $0x108] sm:$0xf]
        %v240 = vld [vmem:[%s169 + $0x10c] sm:$0xf]
        %v241 = vld [vmem:[%s169 + $0x110] sm:$0xf]
        %v242 = vld [vmem:[%s169 + $0x114] sm:$0xf]
        %v243 = vld [vmem:[%s169 + $0x118] sm:$0xf]
        %v244 = vld [vmem:[%s169 + $0x11c] sm:$0xf]
        %v245 = vld [vmem:[%s169 + $0x120] sm:$0xf]
        %v246 = vld [vmem:[%s169 + $0x124] sm:$0xf]
        %v247 = vld [vmem:[%s169 + $0x128] sm:$0xf]
        %v248 = vld [vmem:[%s169 + $0x12c] sm:$0xf]
        %v249 = vld [vmem:[%s169 + $0x130] sm:$0xf]
        %v250 = vld [vmem:[%s169 + $0x134] sm:$0xf]
        %v251 = vld [vmem:[%s169 + $0x138] sm:$0xf]
        %v252 = vld [vmem:[%s169 + $0x13c] sm:$0xf]
        %v253 = vld [vmem:[%s169 + $0x140] sm:$0xf]
        %v254 = vld [vmem:[%s169 + $0x144] sm:$0xf]
        %v255 = vld [vmem:[%s169 + $0x148] sm:$0xf]
        %v256 = vld [vmem:[%s169 + $0x14c] sm:$0xf]
        %v257 = vld [vmem:[%s169 + $0x150] sm:$0xf]
        %v258 = vld [vmem:[%s169 + $0x154] sm:$0xf]
        %v259 = vld [vmem:[%s169 + $0x158] sm:$0xf]
        %v260 = vld [vmem:[%s169 + $0x15c] sm:$0xf]
        %v261 = vld [vmem:[%s169 + $0x160] sm:$0xf]
        %v262 = vld [vmem:[%s169 + $0x164] sm:$0xf]
        %v263 = vld [vmem:[%s169 + $0x168] sm:$0xf]
        %v264 = vld [vmem:[%s169 + $0x16c] sm:$0xf]
        %v265 = vld [vmem:[%s169 + $0x170] sm:$0xf]
        %v266 = vld [vmem:[%s169 + $0x174] sm:$0xf]
        %v267 = vld [vmem:[%s169 + $0x178] sm:$0xf]
        %v268 = vld [vmem:[%s169 + $0x17c] sm:$0xf]
        %v269 = vld [vmem:[%s169 + $0x180] sm:$0xf]
        %v270 = vld [vmem:[%s169 + $0x184] sm:$0xf]
        %v271 = vld [vmem:[%s169 + $0x188] sm:$0xf]
        %v272 = vld [vmem:[%s169 + $0x18c] sm:$0xf]
        %v273 = vld [vmem:[%s169 + $0x190] sm:$0xf]
        %v274 = vld [vmem:[%s169 + $0x194] sm:$0xf]
        %v275 = vld [vmem:[%s169 + $0x198] sm:$0xf]
        %v276 = vld [vmem:[%s169 + $0x19c] sm:$0xf]
        %v277 = vld [vmem:[%s169 + $0x1a0] sm:$0xf]
        %v278 = vld [vmem:[%s169 + $0x1a4] sm:$0xf]
        %v279 = vld [vmem:[%s169 + $0x1a8] sm:$0xf]
        %v280 = vld [vmem:[%s169 + $0x1ac] sm:$0xf]
        %v281 = vld [vmem:[%s169 + $0x1b0] sm:$0xf]
        %v282 = vld [vmem:[%s169 + $0x1b4] sm:$0xf]
        %v283 = vld [vmem:[%s169 + $0x1b8] sm:$0xf]
        %v284 = vld [vmem:[%s169 + $0x1bc] sm:$0xf]
        %v285 = vld [vmem:[%s169 + $0x1c0] sm:$0xf]
        %v286 = vld [vmem:[%s169 + $0x1c4] sm:$0xf]
        %v287 = vld [vmem:[%s169 + $0x1c8] sm:$0xf]
        %v288 = vld [vmem:[%s169 + $0x1cc] sm:$0xf]
        %v289 = vld [vmem:[%s169 + $0x1d0] sm:$0xf]
        %v290 = vld [vmem:[%s169 + $0x1d4] sm:$0xf]
        %v291 = vld [vmem:[%s169 + $0x1d8] sm:$0xf]
        %v292 = vld [vmem:[%s169 + $0x1dc] sm:$0xf]
        %v293 = vld [vmem:[%s169 + $0x1e0] sm:$0xf]
        %v294 = vld [vmem:[%s169 + $0x1e4] sm:$0xf]
        %v295 = vld [vmem:[%s169 + $0x1e8] sm:$0xf]
        %v296 = vld [vmem:[%s169 + $0x1ec] sm:$0xf]
        %v297 = vld [vmem:[%s169 + $0x1f0] sm:$0xf]
        %v298 = vld [vmem:[%s169 + $0x1f4] sm:$0xf]
        %v299 = vld [vmem:[%s169 + $0x1f8] sm:$0xf]
        %v300 = vld [vmem:[%s169 + $0x1fc] sm:$0xf]
        %v301 = vld [vmem:[%s1] sm:$0xf]
        %v302 = vld [vmem:[%s1 + $0x4] sm:$0xf]
        %v303 = vld [vmem:[%s1 + $0x8] sm:$0xf]
        %v304 = vld [vmem:[%s1 + $0xc] sm:$0x3]
        %v305 = vld [vmem:[%s2] sm:$0x1]
        %v307 = vperm.slane %v305, 0
        %v437 = vunpack.c.l.b16 %v173
        %v438 = vunpack.c.l.b16 %v174
        %v439 = vunpack.c.l.b16 %v175
        %v440 = vunpack.c.l.b16 %v176
        %v441 = vunpack.c.l.b16 %v177
        %v442 = vunpack.c.l.b16 %v178
        %v443 = vunpack.c.l.b16 %v179
        %v444 = vunpack.c.l.b16 %v180
        %v445 = vunpack.c.l.b16 %v181
        %v446 = vunpack.c.l.b16 %v182
        %v447 = vunpack.c.l.b16 %v183
        %v448 = vunpack.c.l.b16 %v184
        %v449 = vunpack.c.l.b16 %v185
        %v450 = vunpack.c.l.b16 %v186
        %v451 = vunpack.c.l.b16 %v187
        %v452 = vunpack.c.l.b16 %v188
        %v453 = vunpack.c.l.b16 %v189
        %v454 = vunpack.c.l.b16 %v190
        %v455 = vunpack.c.l.b16 %v191
        %v456 = vunpack.c.l.b16 %v192
        %v457 = vunpack.c.l.b16 %v193
        %v458 = vunpack.c.l.b16 %v194
        %v459 = vunpack.c.l.b16 %v195
        %v460 = vunpack.c.l.b16 %v196
        %v461 = vunpack.c.l.b16 %v197
        %v462 = vunpack.c.l.b16 %v198
        %v463 = vunpack.c.l.b16 %v199
        %v464 = vunpack.c.l.b16 %v200
        %v465 = vunpack.c.l.b16 %v201
        %v466 = vunpack.c.l.b16 %v202
        %v467 = vunpack.c.l.b16 %v203
        %v468 = vunpack.c.l.b16 %v204
        %v469 = vunpack.c.l.b16 %v205
        %v470 = vunpack.c.l.b16 %v206
        %v471 = vunpack.c.l.b16 %v207
        %v472 = vunpack.c.l.b16 %v208
        %v473 = vunpack.c.l.b16 %v209
        %v474 = vunpack.c.l.b16 %v210
        %v475 = vunpack.c.l.b16 %v211
        %v476 = vunpack.c.l.b16 %v212
        %v477 = vunpack.c.l.b16 %v213
        %v478 = vunpack.c.l.b16 %v214
        %v479 = vunpack.c.l.b16 %v215
        %v480 = vunpack.c.l.b16 %v216
        %v481 = vunpack.c.l.b16 %v217
        %v482 = vunpack.c.l.b16 %v218
        %v483 = vunpack.c.l.b16 %v219
        %v484 = vunpack.c.l.b16 %v220
        %v485 = vunpack.c.l.b16 %v221
        %v486 = vunpack.c.l.b16 %v222
        %v487 = vunpack.c.l.b16 %v223
        %v488 = vunpack.c.l.b16 %v224
        %v489 = vunpack.c.l.b16 %v225
        %v490 = vunpack.c.l.b16 %v226
        %v491 = vunpack.c.l.b16 %v227
        %v492 = vunpack.c.l.b16 %v228
        %v493 = vunpack.c.l.b16 %v229
        %v494 = vunpack.c.l.b16 %v230
        %v495 = vunpack.c.l.b16 %v231
        %v496 = vunpack.c.l.b16 %v232
        %v497 = vunpack.c.l.b16 %v233
        %v498 = vunpack.c.l.b16 %v234
        %v499 = vunpack.c.l.b16 %v235
        %v500 = vunpack.c.l.b16 %v236
        %v501 = vunpack.c.l.b16 %v237
        %v502 = vunpack.c.l.b16 %v238
        %v503 = vunpack.c.l.b16 %v239
        %v504 = vunpack.c.l.b16 %v240
        %v505 = vunpack.c.l.b16 %v241
        %v506 = vunpack.c.l.b16 %v242
        %v507 = vunpack.c.l.b16 %v243
        %v508 = vunpack.c.l.b16 %v244
        %v509 = vunpack.c.l.b16 %v245
        %v510 = vunpack.c.l.b16 %v246
        %v511 = vunpack.c.l.b16 %v247
        %v512 = vunpack.c.l.b16 %v248
        %v513 = vunpack.c.l.b16 %v249
        %v514 = vunpack.c.l.b16 %v250
        %v515 = vunpack.c.l.b16 %v251
        %v516 = vunpack.c.l.b16 %v252
        %v517 = vunpack.c.l.b16 %v253
        %v518 = vunpack.c.l.b16 %v254
        %v519 = vunpack.c.l.b16 %v255
        %v520 = vunpack.c.l.b16 %v256
        %v521 = vunpack.c.l.b16 %v257
        %v522 = vunpack.c.l.b16 %v258
        %v523 = vunpack.c.l.b16 %v259
        %v524 = vunpack.c.l.b16 %v260
        %v525 = vunpack.c.l.b16 %v261
        %v526 = vunpack.c.l.b16 %v262
        %v527 = vunpack.c.l.b16 %v263
        %v528 = vunpack.c.l.b16 %v264
        %v529 = vunpack.c.l.b16 %v265
        %v530 = vunpack.c.l.b16 %v266
        %v531 = vunpack.c.l.b16 %v267
        %v532 = vunpack.c.l.b16 %v268
        %v533 = vunpack.c.l.b16 %v269
        %v534 = vunpack.c.l.b16 %v270
        %v535 = vunpack.c.l.b16 %v271
        %v536 = vunpack.c.l.b16 %v272
        %v537 = vunpack.c.l.b16 %v273
        %v538 = vunpack.c.l.b16 %v274
        %v539 = vunpack.c.l.b16 %v275
        %v540 = vunpack.c.l.b16 %v276
        %v541 = vunpack.c.l.b16 %v277
        %v542 = vunpack.c.l.b16 %v278
        %v543 = vunpack.c.l.b16 %v279
        %v544 = vunpack.c.l.b16 %v280
        %v545 = vunpack.c.l.b16 %v281
        %v546 = vunpack.c.l.b16 %v282
        %v547 = vunpack.c.l.b16 %v283
        %v548 = vunpack.c.l.b16 %v284
        %v549 = vunpack.c.l.b16 %v285
        %v550 = vunpack.c.l.b16 %v286
        %v551 = vunpack.c.l.b16 %v287
        %v552 = vunpack.c.l.b16 %v288
        %v553 = vunpack.c.l.b16 %v289
        %v554 = vunpack.c.l.b16 %v290
        %v555 = vunpack.c.l.b16 %v291
        %v556 = vunpack.c.l.b16 %v292
        %v557 = vunpack.c.l.b16 %v293
        %v558 = vunpack.c.l.b16 %v294
        %v559 = vunpack.c.l.b16 %v295
        %v560 = vunpack.c.l.b16 %v296
        %v561 = vunpack.c.l.b16 %v297
        %v562 = vunpack.c.l.b16 %v298
        %v563 = vunpack.c.l.b16 %v299
        %v564 = vunpack.c.l.b16 %v300
        %v565 = vpack.c.b16 %v438, %v437
        %v566 = vpack.c.b16 %v440, %v439
        %v567 = vpack.c.b16 %v442, %v441
        %v568 = vpack.c.b16 %v444, %v443
        %v569 = vpack.c.b16 %v446, %v445
        %v570 = vpack.c.b16 %v448, %v447
        %v571 = vpack.c.b16 %v450, %v449
        %v572 = vpack.c.b16 %v452, %v451
        %v573 = vpack.c.b16 %v454, %v453
        %v574 = vpack.c.b16 %v456, %v455
        %v575 = vpack.c.b16 %v458, %v457
        %v576 = vpack.c.b16 %v460, %v459
        %v577 = vpack.c.b16 %v462, %v461
        %v578 = vpack.c.b16 %v464, %v463
        %v579 = vpack.c.b16 %v466, %v465
        %v580 = vpack.c.b16 %v468, %v467
        %v581 = vpack.c.b16 %v470, %v469
        %v582 = vpack.c.b16 %v472, %v471
        %v583 = vpack.c.b16 %v474, %v473
        %v584 = vpack.c.b16 %v476, %v475
        %v585 = vpack.c.b16 %v478, %v477
        %v586 = vpack.c.b16 %v480, %v479
        %v587 = vpack.c.b16 %v482, %v481
        %v588 = vpack.c.b16 %v484, %v483
        %v589 = vpack.c.b16 %v486, %v485
        %v590 = vpack.c.b16 %v488, %v487
        %v591 = vpack.c.b16 %v490, %v489
        %v592 = vpack.c.b16 %v492, %v491
        %v593 = vpack.c.b16 %v494, %v493
        %v594 = vpack.c.b16 %v496, %v495
        %v595 = vpack.c.b16 %v498, %v497
        %v596 = vpack.c.b16 %v500, %v499
        %v597 = vpack.c.b16 %v502, %v501
        %v598 = vpack.c.b16 %v504, %v503
        %v599 = vpack.c.b16 %v506, %v505
        %v600 = vpack.c.b16 %v508, %v507
        %v601 = vpack.c.b16 %v510, %v509
        %v602 = vpack.c.b16 %v512, %v511
        %v603 = vpack.c.b16 %v514, %v513
        %v604 = vpack.c.b16 %v516, %v515
        %v605 = vpack.c.b16 %v518, %v517
        %v606 = vpack.c.b16 %v520, %v519
        %v607 = vpack.c.b16 %v522, %v521
        %v608 = vpack.c.b16 %v524, %v523
        %v609 = vpack.c.b16 %v526, %v525
        %v610 = vpack.c.b16 %v528, %v527
        %v611 = vpack.c.b16 %v530, %v529
        %v612 = vpack.c.b16 %v532, %v531
        %v613 = vpack.c.b16 %v534, %v533
        %v614 = vpack.c.b16 %v536, %v535
        %v615 = vpack.c.b16 %v538, %v537
        %v616 = vpack.c.b16 %v540, %v539
        %v617 = vpack.c.b16 %v542, %v541
        %v618 = vpack.c.b16 %v544, %v543
        %v619 = vpack.c.b16 %v546, %v545
        %v620 = vpack.c.b16 %v548, %v547
        %v621 = vpack.c.b16 %v550, %v549
        %v622 = vpack.c.b16 %v552, %v551
        %v623 = vpack.c.b16 %v554, %v553
        %v624 = vpack.c.b16 %v556, %v555
        %v625 = vpack.c.b16 %v558, %v557
        %v626 = vpack.c.b16 %v560, %v559
        %v627 = vpack.c.b16 %v562, %v561
        %v628 = vpack.c.b16 %v564, %v563
        %v633 = vunpack.c.l.b16 %v301
        %v634 = vunpack.c.l.b16 %v302
        %v635 = vunpack.c.l.b16 %v303
        %v636 = vunpack.c.l.b16 %v304
        %v637 = vpack.c.b16 %v634, %v633
        %v638 = vpack.c.b16 %v636, %v635
        %vm640 = vcmask 220160
        %v642 = vsel %vm640, %v565, 0
        %v645 = vsel %vm640, %v566, 0
        %v648 = vsel %vm640, %v567, 0
        %v651 = vsel %vm640, %v568, 0
        %v654 = vsel %vm640, %v569, 0
        %v657 = vsel %vm640, %v570, 0
        %v660 = vsel %vm640, %v571, 0
        %v663 = vsel %vm640, %v572, 0
        %v666 = vsel %vm640, %v573, 0
        %v669 = vsel %vm640, %v574, 0
        %v672 = vsel %vm640, %v575, 0
        %v675 = vsel %vm640, %v576, 0
        %v678 = vsel %vm640, %v577, 0
        %v681 = vsel %vm640, %v578, 0
        %v684 = vsel %vm640, %v579, 0
        %v687 = vsel %vm640, %v580, 0
        %v690 = vsel %vm640, %v581, 0
        %v693 = vsel %vm640, %v582, 0
        %v696 = vsel %vm640, %v583, 0
        %v699 = vsel %vm640, %v584, 0
        %v702 = vsel %vm640, %v585, 0
        %v705 = vsel %vm640, %v586, 0
        %v708 = vsel %vm640, %v587, 0
        %v711 = vsel %vm640, %v588, 0
        %v714 = vsel %vm640, %v589, 0
        %v717 = vsel %vm640, %v590, 0
        %v720 = vsel %vm640, %v591, 0
        %v723 = vsel %vm640, %v592, 0
        %v726 = vsel %vm640, %v593, 0
        %v729 = vsel %vm640, %v594, 0
        %v732 = vsel %vm640, %v595, 0
        %v735 = vsel %vm640, %v596, 0
        %v738 = vsel %vm640, %v597, 0
        %v741 = vsel %vm640, %v598, 0
        %v744 = vsel %vm640, %v599, 0
        %v747 = vsel %vm640, %v600, 0
        %v750 = vsel %vm640, %v601, 0
        %v753 = vsel %vm640, %v602, 0
        %v756 = vsel %vm640, %v603, 0
        %v759 = vsel %vm640, %v604, 0
        %v762 = vsel %vm640, %v605, 0
        %v765 = vsel %vm640, %v606, 0
        %v768 = vsel %vm640, %v607, 0
        %v771 = vsel %vm640, %v608, 0
        %v774 = vsel %vm640, %v609, 0
        %v777 = vsel %vm640, %v610, 0
        %v780 = vsel %vm640, %v611, 0
        %v783 = vsel %vm640, %v612, 0
        %v786 = vsel %vm640, %v613, 0
        %v789 = vsel %vm640, %v614, 0
        %v792 = vsel %vm640, %v615, 0
        %v795 = vsel %vm640, %v616, 0
        %v798 = vsel %vm640, %v617, 0
        %v801 = vsel %vm640, %v618, 0
        %v804 = vsel %vm640, %v619, 0
        %v807 = vsel %vm640, %v620, 0
        %v810 = vsel %vm640, %v621, 0
        %v813 = vsel %vm640, %v622, 0
        %v816 = vsel %vm640, %v623, 0
        %v819 = vsel %vm640, %v624, 0
        %v822 = vsel %vm640, %v625, 0
        %v825 = vsel %vm640, %v626, 0
        %v828 = vsel %vm640, %v627, 0
        %v831 = vsel %vm640, %v628, 0
        %vm833 = vcmask 1044480
        %vm834 = vcmask 1045504
        %v835 = vsel %vm833, 4294967295, 65535
        %v836 = vsel %vm834, %v835, 0
        %v838 = vand.u32 %v638, %v836
        %840 = vmatpush.bf16.msra.mxu0 0
        %841 = vmatpush.bf16.msra.mxu0 0
        %842 = vmatpush.bf16.msra.mxu0 0
        %843 = vmatpush.bf16.msra.mxu0 0
        %844 = vmatpush.bf16.msra.mxu0 0
        %845 = vmatpush.bf16.msra.mxu0 0
        %846 = vmatpush.bf16.msra.mxu0 %v838
        %847 = vmatpush.bf16.msra.mxu0 %v637
        %848 = vmatmul.bf16.gmra.mxu0 %v642
        %v849 = vpop.f32.mrf.mxu0
        %v850 = vadd.f32 %v307, %v849
        %v851 = vpop.f32.mrf.mxu0
        %v852 = vadd.f32 %v307, %v851
        %853 = vmatmul.bf16.gmra.mxu0 %v645
        %v854 = vpop.f32.mrf.mxu0
        %v855 = vadd.f32 %v307, %v854
        %v856 = vpop.f32.mrf.mxu0
        %v857 = vadd.f32 %v307, %v856
        %858 = vmatmul.bf16.gmra.mxu0 %v648
        %v859 = vpop.f32.mrf.mxu0
        %v860 = vadd.f32 %v307, %v859
        %v861 = vpop.f32.mrf.mxu0
        %v862 = vadd.f32 %v307, %v861
        %863 = vmatmul.bf16.gmra.mxu0 %v651
        %v864 = vpop.f32.mrf.mxu0
        %v865 = vadd.f32 %v307, %v864
        %v866 = vpop.f32.mrf.mxu0
        %v867 = vadd.f32 %v307, %v866
        %868 = vmatmul.bf16.gmra.mxu0 %v654
        %v869 = vpop.f32.mrf.mxu0
        %v870 = vadd.f32 %v307, %v869
        %v871 = vpop.f32.mrf.mxu0
        %v872 = vadd.f32 %v307, %v871
        %873 = vmatmul.bf16.gmra.mxu0 %v657
        %v874 = vpop.f32.mrf.mxu0
        %v875 = vadd.f32 %v307, %v874
        %v876 = vpop.f32.mrf.mxu0
        %v877 = vadd.f32 %v307, %v876
        %878 = vmatmul.bf16.gmra.mxu0 %v660
        %v879 = vpop.f32.mrf.mxu0
        %v880 = vadd.f32 %v307, %v879
        %v881 = vpop.f32.mrf.mxu0
        %v882 = vadd.f32 %v307, %v881
        %883 = vmatmul.bf16.gmra.mxu0 %v663
        %v884 = vpop.f32.mrf.mxu0
        %v885 = vadd.f32 %v307, %v884
        %v886 = vpop.f32.mrf.mxu0
        %v887 = vadd.f32 %v307, %v886
        %888 = vmatmul.bf16.gmra.mxu0 %v666
        %v889 = vpop.f32.mrf.mxu0
        %v890 = vadd.f32 %v307, %v889
        %v891 = vpop.f32.mrf.mxu0
        %v892 = vadd.f32 %v307, %v891
        %893 = vmatmul.bf16.gmra.mxu0 %v669
        %v894 = vpop.f32.mrf.mxu0
        %v895 = vadd.f32 %v307, %v894
        %v896 = vpop.f32.mrf.mxu0
        %v897 = vadd.f32 %v307, %v896
        %898 = vmatmul.bf16.gmra.mxu0 %v672
        %v899 = vpop.f32.mrf.mxu0
        %v900 = vadd.f32 %v307, %v899
        %v901 = vpop.f32.mrf.mxu0
        %v902 = vadd.f32 %v307, %v901
        %903 = vmatmul.bf16.gmra.mxu0 %v675
        %v904 = vpop.f32.mrf.mxu0
        %v905 = vadd.f32 %v307, %v904
        %v906 = vpop.f32.mrf.mxu0
        %v907 = vadd.f32 %v307, %v906
        %908 = vmatmul.bf16.gmra.mxu0 %v678
        %v909 = vpop.f32.mrf.mxu0
        %v910 = vadd.f32 %v307, %v909
        %v911 = vpop.f32.mrf.mxu0
        %v912 = vadd.f32 %v307, %v911
        %913 = vmatmul.bf16.gmra.mxu0 %v681
        %v914 = vpop.f32.mrf.mxu0
        %v915 = vadd.f32 %v307, %v914
        %v916 = vpop.f32.mrf.mxu0
        %v917 = vadd.f32 %v307, %v916
        %918 = vmatmul.bf16.gmra.mxu0 %v684
        %v919 = vpop.f32.mrf.mxu0
        %v920 = vadd.f32 %v307, %v919
        %v921 = vpop.f32.mrf.mxu0
        %v922 = vadd.f32 %v307, %v921
        %923 = vmatmul.bf16.gmra.mxu0 %v687
        %v924 = vpop.f32.mrf.mxu0
        %v925 = vadd.f32 %v307, %v924
        %v926 = vpop.f32.mrf.mxu0
        %v927 = vadd.f32 %v307, %v926
        %928 = vmatmul.bf16.gmra.mxu0 %v690
        %v929 = vpop.f32.mrf.mxu0
        %v930 = vadd.f32 %v307, %v929
        %v931 = vpop.f32.mrf.mxu0
        %v932 = vadd.f32 %v307, %v931
        %933 = vmatmul.bf16.gmra.mxu0 %v693
        %v934 = vpop.f32.mrf.mxu0
        %v935 = vadd.f32 %v307, %v934
        %v936 = vpop.f32.mrf.mxu0
        %v937 = vadd.f32 %v307, %v936
        %938 = vmatmul.bf16.gmra.mxu0 %v696
        %v939 = vpop.f32.mrf.mxu0
        %v940 = vadd.f32 %v307, %v939
        %v941 = vpop.f32.mrf.mxu0
        %v942 = vadd.f32 %v307, %v941
        %943 = vmatmul.bf16.gmra.mxu0 %v699
        %v944 = vpop.f32.mrf.mxu0
        %v945 = vadd.f32 %v307, %v944
        %v946 = vpop.f32.mrf.mxu0
        %v947 = vadd.f32 %v307, %v946
        %948 = vmatmul.bf16.gmra.mxu0 %v702
        %v949 = vpop.f32.mrf.mxu0
        %v950 = vadd.f32 %v307, %v949
        %v951 = vpop.f32.mrf.mxu0
        %v952 = vadd.f32 %v307, %v951
        %953 = vmatmul.bf16.gmra.mxu0 %v705
        %v954 = vpop.f32.mrf.mxu0
        %v955 = vadd.f32 %v307, %v954
        %v956 = vpop.f32.mrf.mxu0
        %v957 = vadd.f32 %v307, %v956
        %958 = vmatmul.bf16.gmra.mxu0 %v708
        %v959 = vpop.f32.mrf.mxu0
        %v960 = vadd.f32 %v307, %v959
        %v961 = vpop.f32.mrf.mxu0
        %v962 = vadd.f32 %v307, %v961
        %963 = vmatmul.bf16.gmra.mxu0 %v711
        %v964 = vpop.f32.mrf.mxu0
        %v965 = vadd.f32 %v307, %v964
        %v966 = vpop.f32.mrf.mxu0
        %v967 = vadd.f32 %v307, %v966
        %968 = vmatmul.bf16.gmra.mxu0 %v714
        %v969 = vpop.f32.mrf.mxu0
        %v970 = vadd.f32 %v307, %v969
        %v971 = vpop.f32.mrf.mxu0
        %v972 = vadd.f32 %v307, %v971
        %973 = vmatmul.bf16.gmra.mxu0 %v717
        %v974 = vpop.f32.mrf.mxu0
        %v975 = vadd.f32 %v307, %v974
        %v976 = vpop.f32.mrf.mxu0
        %v977 = vadd.f32 %v307, %v976
        %978 = vmatmul.bf16.gmra.mxu0 %v720
        %v979 = vpop.f32.mrf.mxu0
        %v980 = vadd.f32 %v307, %v979
        %v981 = vpop.f32.mrf.mxu0
        %v982 = vadd.f32 %v307, %v981
        %983 = vmatmul.bf16.gmra.mxu0 %v723
        %v984 = vpop.f32.mrf.mxu0
        %v985 = vadd.f32 %v307, %v984
        %v986 = vpop.f32.mrf.mxu0
        %v987 = vadd.f32 %v307, %v986
        %988 = vmatmul.bf16.gmra.mxu0 %v726
        %v989 = vpop.f32.mrf.mxu0
        %v990 = vadd.f32 %v307, %v989
        %v991 = vpop.f32.mrf.mxu0
        %v992 = vadd.f32 %v307, %v991
        %993 = vmatmul.bf16.gmra.mxu0 %v729
        %v994 = vpop.f32.mrf.mxu0
        %v995 = vadd.f32 %v307, %v994
        %v996 = vpop.f32.mrf.mxu0
        %v997 = vadd.f32 %v307, %v996
        %998 = vmatmul.bf16.gmra.mxu0 %v732
        %v999 = vpop.f32.mrf.mxu0
        %v1000 = vadd.f32 %v307, %v999
        %v1001 = vpop.f32.mrf.mxu0
        %v1002 = vadd.f32 %v307, %v1001
        %1003 = vmatmul.bf16.gmra.mxu0 %v735
        %v1004 = vpop.f32.mrf.mxu0
        %v1005 = vadd.f32 %v307, %v1004
        %v1006 = vpop.f32.mrf.mxu0
        %v1007 = vadd.f32 %v307, %v1006
        %1008 = vmatmul.bf16.gmra.mxu0 %v738
        %v1009 = vpop.f32.mrf.mxu0
        %v1010 = vadd.f32 %v307, %v1009
        %v1011 = vpop.f32.mrf.mxu0
        %v1012 = vadd.f32 %v307, %v1011
        %1013 = vmatmul.bf16.gmra.mxu0 %v741
        %v1014 = vpop.f32.mrf.mxu0
        %v1015 = vadd.f32 %v307, %v1014
        %v1016 = vpop.f32.mrf.mxu0
        %v1017 = vadd.f32 %v307, %v1016
        %1018 = vmatmul.bf16.gmra.mxu0 %v744
        %v1019 = vpop.f32.mrf.mxu0
        %v1020 = vadd.f32 %v307, %v1019
        %v1021 = vpop.f32.mrf.mxu0
        %v1022 = vadd.f32 %v307, %v1021
        %1023 = vmatmul.bf16.gmra.mxu0 %v747
        %v1024 = vpop.f32.mrf.mxu0
        %v1025 = vadd.f32 %v307, %v1024
        %v1026 = vpop.f32.mrf.mxu0
        %v1027 = vadd.f32 %v307, %v1026
        %1028 = vmatmul.bf16.gmra.mxu0 %v750
        %v1029 = vpop.f32.mrf.mxu0
        %v1030 = vadd.f32 %v307, %v1029
        %v1031 = vpop.f32.mrf.mxu0
        %v1032 = vadd.f32 %v307, %v1031
        %1033 = vmatmul.bf16.gmra.mxu0 %v753
        %v1034 = vpop.f32.mrf.mxu0
        %v1035 = vadd.f32 %v307, %v1034
        %v1036 = vpop.f32.mrf.mxu0
        %v1037 = vadd.f32 %v307, %v1036
        %1038 = vmatmul.bf16.gmra.mxu0 %v756
        %v1039 = vpop.f32.mrf.mxu0
        %v1040 = vadd.f32 %v307, %v1039
        %v1041 = vpop.f32.mrf.mxu0
        %v1042 = vadd.f32 %v307, %v1041
        %1043 = vmatmul.bf16.gmra.mxu0 %v759
        %v1044 = vpop.f32.mrf.mxu0
        %v1045 = vadd.f32 %v307, %v1044
        %v1046 = vpop.f32.mrf.mxu0
        %v1047 = vadd.f32 %v307, %v1046
        %1048 = vmatmul.bf16.gmra.mxu0 %v762
        %v1049 = vpop.f32.mrf.mxu0
        %v1050 = vadd.f32 %v307, %v1049
        %v1051 = vpop.f32.mrf.mxu0
        %v1052 = vadd.f32 %v307, %v1051
        %1053 = vmatmul.bf16.gmra.mxu0 %v765
        %v1054 = vpop.f32.mrf.mxu0
        %v1055 = vadd.f32 %v307, %v1054
        %v1056 = vpop.f32.mrf.mxu0
        %v1057 = vadd.f32 %v307, %v1056
        %1058 = vmatmul.bf16.gmra.mxu0 %v768
        %v1059 = vpop.f32.mrf.mxu0
        %v1060 = vadd.f32 %v307, %v1059
        %v1061 = vpop.f32.mrf.mxu0
        %v1062 = vadd.f32 %v307, %v1061
        %1063 = vmatmul.bf16.gmra.mxu0 %v771
        %v1064 = vpop.f32.mrf.mxu0
        %v1065 = vadd.f32 %v307, %v1064
        %v1066 = vpop.f32.mrf.mxu0
        %v1067 = vadd.f32 %v307, %v1066
        %1068 = vmatmul.bf16.gmra.mxu0 %v774
        %v1069 = vpop.f32.mrf.mxu0
        %v1070 = vadd.f32 %v307, %v1069
        %v1071 = vpop.f32.mrf.mxu0
        %v1072 = vadd.f32 %v307, %v1071
        %1073 = vmatmul.bf16.gmra.mxu0 %v777
        %v1074 = vpop.f32.mrf.mxu0
        %v1075 = vadd.f32 %v307, %v1074
        %v1076 = vpop.f32.mrf.mxu0
        %v1077 = vadd.f32 %v307, %v1076
        %1078 = vmatmul.bf16.gmra.mxu0 %v780
        %v1079 = vpop.f32.mrf.mxu0
        %v1080 = vadd.f32 %v307, %v1079
        %v1081 = vpop.f32.mrf.mxu0
        %v1082 = vadd.f32 %v307, %v1081
        %1083 = vmatmul.bf16.gmra.mxu0 %v783
        %v1084 = vpop.f32.mrf.mxu0
        %v1085 = vadd.f32 %v307, %v1084
        %v1086 = vpop.f32.mrf.mxu0
        %v1087 = vadd.f32 %v307, %v1086
        %1088 = vmatmul.bf16.gmra.mxu0 %v786
        %v1089 = vpop.f32.mrf.mxu0
        %v1090 = vadd.f32 %v307, %v1089
        %v1091 = vpop.f32.mrf.mxu0
        %v1092 = vadd.f32 %v307, %v1091
        %1093 = vmatmul.bf16.gmra.mxu0 %v789
        %v1094 = vpop.f32.mrf.mxu0
        %v1095 = vadd.f32 %v307, %v1094
        %v1096 = vpop.f32.mrf.mxu0
        %v1097 = vadd.f32 %v307, %v1096
        %1098 = vmatmul.bf16.gmra.mxu0 %v792
        %v1099 = vpop.f32.mrf.mxu0
        %v1100 = vadd.f32 %v307, %v1099
        %v1101 = vpop.f32.mrf.mxu0
        %v1102 = vadd.f32 %v307, %v1101
        %1103 = vmatmul.bf16.gmra.mxu0 %v795
        %v1104 = vpop.f32.mrf.mxu0
        %v1105 = vadd.f32 %v307, %v1104
        %v1106 = vpop.f32.mrf.mxu0
        %v1107 = vadd.f32 %v307, %v1106
        %1108 = vmatmul.bf16.gmra.mxu0 %v798
        %v1109 = vpop.f32.mrf.mxu0
        %v1110 = vadd.f32 %v307, %v1109
        %v1111 = vpop.f32.mrf.mxu0
        %v1112 = vadd.f32 %v307, %v1111
        %1113 = vmatmul.bf16.gmra.mxu0 %v801
        %v1114 = vpop.f32.mrf.mxu0
        %v1115 = vadd.f32 %v307, %v1114
        %v1116 = vpop.f32.mrf.mxu0
        %v1117 = vadd.f32 %v307, %v1116
        %1118 = vmatmul.bf16.gmra.mxu0 %v804
        %v1119 = vpop.f32.mrf.mxu0
        %v1120 = vadd.f32 %v307, %v1119
        %v1121 = vpop.f32.mrf.mxu0
        %v1122 = vadd.f32 %v307, %v1121
        %1123 = vmatmul.bf16.gmra.mxu0 %v807
        %v1124 = vpop.f32.mrf.mxu0
        %v1125 = vadd.f32 %v307, %v1124
        %v1126 = vpop.f32.mrf.mxu0
        %v1127 = vadd.f32 %v307, %v1126
        %1128 = vmatmul.bf16.gmra.mxu0 %v810
        %v1129 = vpop.f32.mrf.mxu0
        %v1130 = vadd.f32 %v307, %v1129
        %v1131 = vpop.f32.mrf.mxu0
        %v1132 = vadd.f32 %v307, %v1131
        %1133 = vmatmul.bf16.gmra.mxu0 %v813
        %v1134 = vpop.f32.mrf.mxu0
        %v1135 = vadd.f32 %v307, %v1134
        %v1136 = vpop.f32.mrf.mxu0
        %v1137 = vadd.f32 %v307, %v1136
        %1138 = vmatmul.bf16.gmra.mxu0 %v816
        %v1139 = vpop.f32.mrf.mxu0
        %v1140 = vadd.f32 %v307, %v1139
        %v1141 = vpop.f32.mrf.mxu0
        %v1142 = vadd.f32 %v307, %v1141
        %1143 = vmatmul.bf16.gmra.mxu0 %v819
        %v1144 = vpop.f32.mrf.mxu0
        %v1145 = vadd.f32 %v307, %v1144
        %v1146 = vpop.f32.mrf.mxu0
        %v1147 = vadd.f32 %v307, %v1146
        %1148 = vmatmul.bf16.gmra.mxu0 %v822
        %v1149 = vpop.f32.mrf.mxu0
        %v1150 = vadd.f32 %v307, %v1149
        %v1151 = vpop.f32.mrf.mxu0
        %v1152 = vadd.f32 %v307, %v1151
        %1153 = vmatmul.bf16.gmra.mxu0 %v825
        %v1154 = vpop.f32.mrf.mxu0
        %v1155 = vadd.f32 %v307, %v1154
        %v1156 = vpop.f32.mrf.mxu0
        %v1157 = vadd.f32 %v307, %v1156
        %1158 = vmatmul.bf16.gmra.mxu0 %v828
        %v1159 = vpop.f32.mrf.mxu0
        %v1160 = vadd.f32 %v307, %v1159
        %v1161 = vpop.f32.mrf.mxu0
        %v1162 = vadd.f32 %v307, %v1161
        %1163 = vmatmul.bf16.gmra.mxu0 %v831
        %v1164 = vpop.f32.mrf.mxu0
        %v1165 = vadd.f32 %v307, %v1164
        %v1166 = vpop.f32.mrf.mxu0
        %v1167 = vadd.f32 %v307, %v1166
        %1168 = vdwg.mxu0
        %v1169 = vmax.f32 %v850, 0.0
        %v1170 = vmax.f32 %v852, 0.0
        %v1171 = vmax.f32 %v855, 0.0
        %v1172 = vmax.f32 %v857, 0.0
        %v1173 = vmax.f32 %v860, 0.0
        %v1174 = vmax.f32 %v862, 0.0
        %v1175 = vmax.f32 %v865, 0.0
        %v1176 = vmax.f32 %v867, 0.0
        %v1177 = vmax.f32 %v870, 0.0
        %v1178 = vmax.f32 %v872, 0.0
        %v1179 = vmax.f32 %v875, 0.0
        %v1180 = vmax.f32 %v877, 0.0
        %v1181 = vmax.f32 %v880, 0.0
        %v1182 = vmax.f32 %v882, 0.0
        %v1183 = vmax.f32 %v885, 0.0
        %v1184 = vmax.f32 %v887, 0.0
        %v1185 = vmax.f32 %v890, 0.0
        %v1186 = vmax.f32 %v892, 0.0
        %v1187 = vmax.f32 %v895, 0.0
        %v1188 = vmax.f32 %v897, 0.0
        %v1189 = vmax.f32 %v900, 0.0
        %v1190 = vmax.f32 %v902, 0.0
        %v1191 = vmax.f32 %v905, 0.0
        %v1192 = vmax.f32 %v907, 0.0
        %v1193 = vmax.f32 %v910, 0.0
        %v1194 = vmax.f32 %v912, 0.0
        %v1195 = vmax.f32 %v915, 0.0
        %v1196 = vmax.f32 %v917, 0.0
        %v1197 = vmax.f32 %v920, 0.0
        %v1198 = vmax.f32 %v922, 0.0
        %v1199 = vmax.f32 %v925, 0.0
        %v1200 = vmax.f32 %v927, 0.0
        %v1201 = vmax.f32 %v930, 0.0
        %v1202 = vmax.f32 %v932, 0.0
        %v1203 = vmax.f32 %v935, 0.0
        %v1204 = vmax.f32 %v937, 0.0
        %v1205 = vmax.f32 %v940, 0.0
        %v1206 = vmax.f32 %v942, 0.0
        %v1207 = vmax.f32 %v945, 0.0
        %v1208 = vmax.f32 %v947, 0.0
        %v1209 = vmax.f32 %v950, 0.0
        %v1210 = vmax.f32 %v952, 0.0
        %v1211 = vmax.f32 %v955, 0.0
        %v1212 = vmax.f32 %v957, 0.0
        %v1213 = vmax.f32 %v960, 0.0
        %v1214 = vmax.f32 %v962, 0.0
        %v1215 = vmax.f32 %v965, 0.0
        %v1216 = vmax.f32 %v967, 0.0
        %v1217 = vmax.f32 %v970, 0.0
        %v1218 = vmax.f32 %v972, 0.0
        %v1219 = vmax.f32 %v975, 0.0
        %v1220 = vmax.f32 %v977, 0.0
        %v1221 = vmax.f32 %v980, 0.0
        %v1222 = vmax.f32 %v982, 0.0
        %v1223 = vmax.f32 %v985, 0.0
        %v1224 = vmax.f32 %v987, 0.0
        %v1225 = vmax.f32 %v990, 0.0
        %v1226 = vmax.f32 %v992, 0.0
        %v1227 = vmax.f32 %v995, 0.0
        %v1228 = vmax.f32 %v997, 0.0
        %v1229 = vmax.f32 %v1000, 0.0
        %v1230 = vmax.f32 %v1002, 0.0
        %v1231 = vmax.f32 %v1005, 0.0
        %v1232 = vmax.f32 %v1007, 0.0
        %v1233 = vmax.f32 %v1010, 0.0
        %v1234 = vmax.f32 %v1012, 0.0
        %v1235 = vmax.f32 %v1015, 0.0
        %v1236 = vmax.f32 %v1017, 0.0
        %v1237 = vmax.f32 %v1020, 0.0
        %v1238 = vmax.f32 %v1022, 0.0
        %v1239 = vmax.f32 %v1025, 0.0
        %v1240 = vmax.f32 %v1027, 0.0
        %v1241 = vmax.f32 %v1030, 0.0
        %v1242 = vmax.f32 %v1032, 0.0
        %v1243 = vmax.f32 %v1035, 0.0
        %v1244 = vmax.f32 %v1037, 0.0
        %v1245 = vmax.f32 %v1040, 0.0
        %v1246 = vmax.f32 %v1042, 0.0
        %v1247 = vmax.f32 %v1045, 0.0
        %v1248 = vmax.f32 %v1047, 0.0
        %v1249 = vmax.f32 %v1050, 0.0
        %v1250 = vmax.f32 %v1052, 0.0
        %v1251 = vmax.f32 %v1055, 0.0
        %v1252 = vmax.f32 %v1057, 0.0
        %v1253 = vmax.f32 %v1060, 0.0
        %v1254 = vmax.f32 %v1062, 0.0
        %v1255 = vmax.f32 %v1065, 0.0
        %v1256 = vmax.f32 %v1067, 0.0
        %v1257 = vmax.f32 %v1070, 0.0
        %v1258 = vmax.f32 %v1072, 0.0
        %v1259 = vmax.f32 %v1075, 0.0
        %v1260 = vmax.f32 %v1077, 0.0
        %v1261 = vmax.f32 %v1080, 0.0
        %v1262 = vmax.f32 %v1082, 0.0
        %v1263 = vmax.f32 %v1085, 0.0
        %v1264 = vmax.f32 %v1087, 0.0
        %v1265 = vmax.f32 %v1090, 0.0
        %v1266 = vmax.f32 %v1092, 0.0
        %v1267 = vmax.f32 %v1095, 0.0
        %v1268 = vmax.f32 %v1097, 0.0
        %v1269 = vmax.f32 %v1100, 0.0
        %v1270 = vmax.f32 %v1102, 0.0
        %v1271 = vmax.f32 %v1105, 0.0
        %v1272 = vmax.f32 %v1107, 0.0
        %v1273 = vmax.f32 %v1110, 0.0
        %v1274 = vmax.f32 %v1112, 0.0
        %v1275 = vmax.f32 %v1115, 0.0
        %v1276 = vmax.f32 %v1117, 0.0
        %v1277 = vmax.f32 %v1120, 0.0
        %v1278 = vmax.f32 %v1122, 0.0
        %v1279 = vmax.f32 %v1125, 0.0
        %v1280 = vmax.f32 %v1127, 0.0
        %v1281 = vmax.f32 %v1130, 0.0
        %v1282 = vmax.f32 %v1132, 0.0
        %v1283 = vmax.f32 %v1135, 0.0
        %v1284 = vmax.f32 %v1137, 0.0
        %v1285 = vmax.f32 %v1140, 0.0
        %v1286 = vmax.f32 %v1142, 0.0
        %v1287 = vmax.f32 %v1145, 0.0
        %v1288 = vmax.f32 %v1147, 0.0
        %v1289 = vmax.f32 %v1150, 0.0
        %v1290 = vmax.f32 %v1152, 0.0
        %v1291 = vmax.f32 %v1155, 0.0
        %v1292 = vmax.f32 %v1157, 0.0
        %v1293 = vmax.f32 %v1160, 0.0
        %v1294 = vmax.f32 %v1162, 0.0
        %v1295 = vmax.f32 %v1165, 0.0
        %v1296 = vmax.f32 %v1167, 0.0
        %v1297 = vpack.c.bf16 %v1169, %v1169
        %v1298 = vpack.c.bf16 %v1170, %v1170
        %v1299 = vpack.c.bf16 %v1171, %v1171
        %v1300 = vpack.c.bf16 %v1172, %v1172
        %v1301 = vpack.c.bf16 %v1173, %v1173
        %v1302 = vpack.c.bf16 %v1174, %v1174
        %v1303 = vpack.c.bf16 %v1175, %v1175
        %v1304 = vpack.c.bf16 %v1176, %v1176
        %v1305 = vpack.c.bf16 %v1177, %v1177
        %v1306 = vpack.c.bf16 %v1178, %v1178
        %v1307 = vpack.c.bf16 %v1179, %v1179
        %v1308 = vpack.c.bf16 %v1180, %v1180
        %v1309 = vpack.c.bf16 %v1181, %v1181
        %v1310 = vpack.c.bf16 %v1182, %v1182
        %v1311 = vpack.c.bf16 %v1183, %v1183
        %v1312 = vpack.c.bf16 %v1184, %v1184
        %v1313 = vpack.c.bf16 %v1185, %v1185
        %v1314 = vpack.c.bf16 %v1186, %v1186
        %v1315 = vpack.c.bf16 %v1187, %v1187
        %v1316 = vpack.c.bf16 %v1188, %v1188
        %v1317 = vpack.c.bf16 %v1189, %v1189
        %v1318 = vpack.c.bf16 %v1190, %v1190
        %v1319 = vpack.c.bf16 %v1191, %v1191
        %v1320 = vpack.c.bf16 %v1192, %v1192
        %v1321 = vpack.c.bf16 %v1193, %v1193
        %v1322 = vpack.c.bf16 %v1194, %v1194
        %v1323 = vpack.c.bf16 %v1195, %v1195
        %v1324 = vpack.c.bf16 %v1196, %v1196
        %v1325 = vpack.c.bf16 %v1197, %v1197
        %v1326 = vpack.c.bf16 %v1198, %v1198
        %v1327 = vpack.c.bf16 %v1199, %v1199
        %v1328 = vpack.c.bf16 %v1200, %v1200
        %v1329 = vpack.c.bf16 %v1201, %v1201
        %v1330 = vpack.c.bf16 %v1202, %v1202
        %v1331 = vpack.c.bf16 %v1203, %v1203
        %v1332 = vpack.c.bf16 %v1204, %v1204
        %v1333 = vpack.c.bf16 %v1205, %v1205
        %v1334 = vpack.c.bf16 %v1206, %v1206
        %v1335 = vpack.c.bf16 %v1207, %v1207
        %v1336 = vpack.c.bf16 %v1208, %v1208
        %v1337 = vpack.c.bf16 %v1209, %v1209
        %v1338 = vpack.c.bf16 %v1210, %v1210
        %v1339 = vpack.c.bf16 %v1211, %v1211
        %v1340 = vpack.c.bf16 %v1212, %v1212
        %v1341 = vpack.c.bf16 %v1213, %v1213
        %v1342 = vpack.c.bf16 %v1214, %v1214
        %v1343 = vpack.c.bf16 %v1215, %v1215
        %v1344 = vpack.c.bf16 %v1216, %v1216
        %v1345 = vpack.c.bf16 %v1217, %v1217
        %v1346 = vpack.c.bf16 %v1218, %v1218
        %v1347 = vpack.c.bf16 %v1219, %v1219
        %v1348 = vpack.c.bf16 %v1220, %v1220
        %v1349 = vpack.c.bf16 %v1221, %v1221
        %v1350 = vpack.c.bf16 %v1222, %v1222
        %v1351 = vpack.c.bf16 %v1223, %v1223
        %v1352 = vpack.c.bf16 %v1224, %v1224
        %v1353 = vpack.c.bf16 %v1225, %v1225
        %v1354 = vpack.c.bf16 %v1226, %v1226
        %v1355 = vpack.c.bf16 %v1227, %v1227
        %v1356 = vpack.c.bf16 %v1228, %v1228
        %v1357 = vpack.c.bf16 %v1229, %v1229
        %v1358 = vpack.c.bf16 %v1230, %v1230
        %v1359 = vpack.c.bf16 %v1231, %v1231
        %v1360 = vpack.c.bf16 %v1232, %v1232
        %v1361 = vpack.c.bf16 %v1233, %v1233
        %v1362 = vpack.c.bf16 %v1234, %v1234
        %v1363 = vpack.c.bf16 %v1235, %v1235
        %v1364 = vpack.c.bf16 %v1236, %v1236
        %v1365 = vpack.c.bf16 %v1237, %v1237
        %v1366 = vpack.c.bf16 %v1238, %v1238
        %v1367 = vpack.c.bf16 %v1239, %v1239
        %v1368 = vpack.c.bf16 %v1240, %v1240
        %v1369 = vpack.c.bf16 %v1241, %v1241
        %v1370 = vpack.c.bf16 %v1242, %v1242
        %v1371 = vpack.c.bf16 %v1243, %v1243
        %v1372 = vpack.c.bf16 %v1244, %v1244
        %v1373 = vpack.c.bf16 %v1245, %v1245
        %v1374 = vpack.c.bf16 %v1246, %v1246
        %v1375 = vpack.c.bf16 %v1247, %v1247
        %v1376 = vpack.c.bf16 %v1248, %v1248
        %v1377 = vpack.c.bf16 %v1249, %v1249
        %v1378 = vpack.c.bf16 %v1250, %v1250
        %v1379 = vpack.c.bf16 %v1251, %v1251
        %v1380 = vpack.c.bf16 %v1252, %v1252
        %v1381 = vpack.c.bf16 %v1253, %v1253
        %v1382 = vpack.c.bf16 %v1254, %v1254
        %v1383 = vpack.c.bf16 %v1255, %v1255
        %v1384 = vpack.c.bf16 %v1256, %v1256
        %v1385 = vpack.c.bf16 %v1257, %v1257
        %v1386 = vpack.c.bf16 %v1258, %v1258
        %v1387 = vpack.c.bf16 %v1259, %v1259
        %v1388 = vpack.c.bf16 %v1260, %v1260
        %v1389 = vpack.c.bf16 %v1261, %v1261
        %v1390 = vpack.c.bf16 %v1262, %v1262
        %v1391 = vpack.c.bf16 %v1263, %v1263
        %v1392 = vpack.c.bf16 %v1264, %v1264
        %v1393 = vpack.c.bf16 %v1265, %v1265
        %v1394 = vpack.c.bf16 %v1266, %v1266
        %v1395 = vpack.c.bf16 %v1267, %v1267
        %v1396 = vpack.c.bf16 %v1268, %v1268
        %v1397 = vpack.c.bf16 %v1269, %v1269
        %v1398 = vpack.c.bf16 %v1270, %v1270
        %v1399 = vpack.c.bf16 %v1271, %v1271
        %v1400 = vpack.c.bf16 %v1272, %v1272
        %v1401 = vpack.c.bf16 %v1273, %v1273
        %v1402 = vpack.c.bf16 %v1274, %v1274
        %v1403 = vpack.c.bf16 %v1275, %v1275
        %v1404 = vpack.c.bf16 %v1276, %v1276
        %v1405 = vpack.c.bf16 %v1277, %v1277
        %v1406 = vpack.c.bf16 %v1278, %v1278
        %v1407 = vpack.c.bf16 %v1279, %v1279
        %v1408 = vpack.c.bf16 %v1280, %v1280
        %v1409 = vpack.c.bf16 %v1281, %v1281
        %v1410 = vpack.c.bf16 %v1282, %v1282
        %v1411 = vpack.c.bf16 %v1283, %v1283
        %v1412 = vpack.c.bf16 %v1284, %v1284
        %v1413 = vpack.c.bf16 %v1285, %v1285
        %v1414 = vpack.c.bf16 %v1286, %v1286
        %v1415 = vpack.c.bf16 %v1287, %v1287
        %v1416 = vpack.c.bf16 %v1288, %v1288
        %v1417 = vpack.c.bf16 %v1289, %v1289
        %v1418 = vpack.c.bf16 %v1290, %v1290
        %v1419 = vpack.c.bf16 %v1291, %v1291
        %v1420 = vpack.c.bf16 %v1292, %v1292
        %v1421 = vpack.c.bf16 %v1293, %v1293
        %v1422 = vpack.c.bf16 %v1294, %v1294
        %v1423 = vpack.c.bf16 %v1295, %v1295
        %v1424 = vpack.c.bf16 %v1296, %v1296
        %1425 = vst [vmem:[%s164] sm:$0xf] %v1297
        %1426 = vst [vmem:[%s164 + $0x4] sm:$0xf] %v1298
        %1427 = vst [vmem:[%s164 + $0x8] sm:$0xf] %v1299
        %1428 = vst [vmem:[%s164 + $0xc] sm:$0xf] %v1300
        %1429 = vst [vmem:[%s164 + $0x10] sm:$0xf] %v1301
        %1430 = vst [vmem:[%s164 + $0x14] sm:$0xf] %v1302
        %1431 = vst [vmem:[%s164 + $0x18] sm:$0xf] %v1303
        %1432 = vst [vmem:[%s164 + $0x1c] sm:$0xf] %v1304
        %1433 = vst [vmem:[%s164 + $0x20] sm:$0xf] %v1305
        %1434 = vst [vmem:[%s164 + $0x24] sm:$0xf] %v1306
        %1435 = vst [vmem:[%s164 + $0x28] sm:$0xf] %v1307
        %1436 = vst [vmem:[%s164 + $0x2c] sm:$0xf] %v1308
        %1437 = vst [vmem:[%s164 + $0x30] sm:$0xf] %v1309
        %1438 = vst [vmem:[%s164 + $0x34] sm:$0xf] %v1310
        %1439 = vst [vmem:[%s164 + $0x38] sm:$0xf] %v1311
        %1440 = vst [vmem:[%s164 + $0x3c] sm:$0xf] %v1312
        %1441 = vst [vmem:[%s164 + $0x40] sm:$0xf] %v1313
        %1442 = vst [vmem:[%s164 + $0x44] sm:$0xf] %v1314
        %1443 = vst [vmem:[%s164 + $0x48] sm:$0xf] %v1315
        %1444 = vst [vmem:[%s164 + $0x4c] sm:$0xf] %v1316
        %1445 = vst [vmem:[%s164 + $0x50] sm:$0xf] %v1317
        %1446 = vst [vmem:[%s164 + $0x54] sm:$0xf] %v1318
        %1447 = vst [vmem:[%s164 + $0x58] sm:$0xf] %v1319
        %1448 = vst [vmem:[%s164 + $0x5c] sm:$0xf] %v1320
        %1449 = vst [vmem:[%s164 + $0x60] sm:$0xf] %v1321
        %1450 = vst [vmem:[%s164 + $0x64] sm:$0xf] %v1322
        %1451 = vst [vmem:[%s164 + $0x68] sm:$0xf] %v1323
        %1452 = vst [vmem:[%s164 + $0x6c] sm:$0xf] %v1324
        %1453 = vst [vmem:[%s164 + $0x70] sm:$0xf] %v1325
        %1454 = vst [vmem:[%s164 + $0x74] sm:$0xf] %v1326
        %1455 = vst [vmem:[%s164 + $0x78] sm:$0xf] %v1327
        %1456 = vst [vmem:[%s164 + $0x7c] sm:$0xf] %v1328
        %1457 = vst [vmem:[%s164 + $0x80] sm:$0xf] %v1329
        %1458 = vst [vmem:[%s164 + $0x84] sm:$0xf] %v1330
        %1459 = vst [vmem:[%s164 + $0x88] sm:$0xf] %v1331
        %1460 = vst [vmem:[%s164 + $0x8c] sm:$0xf] %v1332
        %1461 = vst [vmem:[%s164 + $0x90] sm:$0xf] %v1333
        %1462 = vst [vmem:[%s164 + $0x94] sm:$0xf] %v1334
        %1463 = vst [vmem:[%s164 + $0x98] sm:$0xf] %v1335
        %1464 = vst [vmem:[%s164 + $0x9c] sm:$0xf] %v1336
        %1465 = vst [vmem:[%s164 + $0xa0] sm:$0xf] %v1337
        %1466 = vst [vmem:[%s164 + $0xa4] sm:$0xf] %v1338
        %1467 = vst [vmem:[%s164 + $0xa8] sm:$0xf] %v1339
        %1468 = vst [vmem:[%s164 + $0xac] sm:$0xf] %v1340
        %1469 = vst [vmem:[%s164 + $0xb0] sm:$0xf] %v1341
        %1470 = vst [vmem:[%s164 + $0xb4] sm:$0xf] %v1342
        %1471 = vst [vmem:[%s164 + $0xb8] sm:$0xf] %v1343
        %1472 = vst [vmem:[%s164 + $0xbc] sm:$0xf] %v1344
        %1473 = vst [vmem:[%s164 + $0xc0] sm:$0xf] %v1345
        %1474 = vst [vmem:[%s164 + $0xc4] sm:$0xf] %v1346
        %1475 = vst [vmem:[%s164 + $0xc8] sm:$0xf] %v1347
        %1476 = vst [vmem:[%s164 + $0xcc] sm:$0xf] %v1348
        %1477 = vst [vmem:[%s164 + $0xd0] sm:$0xf] %v1349
        %1478 = vst [vmem:[%s164 + $0xd4] sm:$0xf] %v1350
        %1479 = vst [vmem:[%s164 + $0xd8] sm:$0xf] %v1351
        %1480 = vst [vmem:[%s164 + $0xdc] sm:$0xf] %v1352
        %1481 = vst [vmem:[%s164 + $0xe0] sm:$0xf] %v1353
        %1482 = vst [vmem:[%s164 + $0xe4] sm:$0xf] %v1354
        %1483 = vst [vmem:[%s164 + $0xe8] sm:$0xf] %v1355
        %1484 = vst [vmem:[%s164 + $0xec] sm:$0xf] %v1356
        %1485 = vst [vmem:[%s164 + $0xf0] sm:$0xf] %v1357
        %1486 = vst [vmem:[%s164 + $0xf4] sm:$0xf] %v1358
        %1487 = vst [vmem:[%s164 + $0xf8] sm:$0xf] %v1359
        %1488 = vst [vmem:[%s164 + $0xfc] sm:$0xf] %v1360
        %1489 = vst [vmem:[%s164 + $0x100] sm:$0xf] %v1361
        %1490 = vst [vmem:[%s164 + $0x104] sm:$0xf] %v1362
        %1491 = vst [vmem:[%s164 + $0x108] sm:$0xf] %v1363
        %1492 = vst [vmem:[%s164 + $0x10c] sm:$0xf] %v1364
        %1493 = vst [vmem:[%s164 + $0x110] sm:$0xf] %v1365
        %1494 = vst [vmem:[%s164 + $0x114] sm:$0xf] %v1366
        %1495 = vst [vmem:[%s164 + $0x118] sm:$0xf] %v1367
        %1496 = vst [vmem:[%s164 + $0x11c] sm:$0xf] %v1368
        %1497 = vst [vmem:[%s164 + $0x120] sm:$0xf] %v1369
        %1498 = vst [vmem:[%s164 + $0x124] sm:$0xf] %v1370
        %1499 = vst [vmem:[%s164 + $0x128] sm:$0xf] %v1371
        %1500 = vst [vmem:[%s164 + $0x12c] sm:$0xf] %v1372
        %1501 = vst [vmem:[%s164 + $0x130] sm:$0xf] %v1373
        %1502 = vst [vmem:[%s164 + $0x134] sm:$0xf] %v1374
        %1503 = vst [vmem:[%s164 + $0x138] sm:$0xf] %v1375
        %1504 = vst [vmem:[%s164 + $0x13c] sm:$0xf] %v1376
        %1505 = vst [vmem:[%s164 + $0x140] sm:$0xf] %v1377
        %1506 = vst [vmem:[%s164 + $0x144] sm:$0xf] %v1378
        %1507 = vst [vmem:[%s164 + $0x148] sm:$0xf] %v1379
        %1508 = vst [vmem:[%s164 + $0x14c] sm:$0xf] %v1380
        %1509 = vst [vmem:[%s164 + $0x150] sm:$0xf] %v1381
        %1510 = vst [vmem:[%s164 + $0x154] sm:$0xf] %v1382
        %1511 = vst [vmem:[%s164 + $0x158] sm:$0xf] %v1383
        %1512 = vst [vmem:[%s164 + $0x15c] sm:$0xf] %v1384
        %1513 = vst [vmem:[%s164 + $0x160] sm:$0xf] %v1385
        %1514 = vst [vmem:[%s164 + $0x164] sm:$0xf] %v1386
        %1515 = vst [vmem:[%s164 + $0x168] sm:$0xf] %v1387
        %1516 = vst [vmem:[%s164 + $0x16c] sm:$0xf] %v1388
        %1517 = vst [vmem:[%s164 + $0x170] sm:$0xf] %v1389
        %1518 = vst [vmem:[%s164 + $0x174] sm:$0xf] %v1390
        %1519 = vst [vmem:[%s164 + $0x178] sm:$0xf] %v1391
        %1520 = vst [vmem:[%s164 + $0x17c] sm:$0xf] %v1392
        %1521 = vst [vmem:[%s164 + $0x180] sm:$0xf] %v1393
        %1522 = vst [vmem:[%s164 + $0x184] sm:$0xf] %v1394
        %1523 = vst [vmem:[%s164 + $0x188] sm:$0xf] %v1395
        %1524 = vst [vmem:[%s164 + $0x18c] sm:$0xf] %v1396
        %1525 = vst [vmem:[%s164 + $0x190] sm:$0xf] %v1397
        %1526 = vst [vmem:[%s164 + $0x194] sm:$0xf] %v1398
        %1527 = vst [vmem:[%s164 + $0x198] sm:$0xf] %v1399
        %1528 = vst [vmem:[%s164 + $0x19c] sm:$0xf] %v1400
        %1529 = vst [vmem:[%s164 + $0x1a0] sm:$0xf] %v1401
        %1530 = vst [vmem:[%s164 + $0x1a4] sm:$0xf] %v1402
        %1531 = vst [vmem:[%s164 + $0x1a8] sm:$0xf] %v1403
        %1532 = vst [vmem:[%s164 + $0x1ac] sm:$0xf] %v1404
        %1533 = vst [vmem:[%s164 + $0x1b0] sm:$0xf] %v1405
        %1534 = vst [vmem:[%s164 + $0x1b4] sm:$0xf] %v1406
        %1535 = vst [vmem:[%s164 + $0x1b8] sm:$0xf] %v1407
        %1536 = vst [vmem:[%s164 + $0x1bc] sm:$0xf] %v1408
        %1537 = vst [vmem:[%s164 + $0x1c0] sm:$0xf] %v1409
        %1538 = vst [vmem:[%s164 + $0x1c4] sm:$0xf] %v1410
        %1539 = vst [vmem:[%s164 + $0x1c8] sm:$0xf] %v1411
        %1540 = vst [vmem:[%s164 + $0x1cc] sm:$0xf] %v1412
        %1541 = vst [vmem:[%s164 + $0x1d0] sm:$0xf] %v1413
        %1542 = vst [vmem:[%s164 + $0x1d4] sm:$0xf] %v1414
        %1543 = vst [vmem:[%s164 + $0x1d8] sm:$0xf] %v1415
        %1544 = vst [vmem:[%s164 + $0x1dc] sm:$0xf] %v1416
        %1545 = vst [vmem:[%s164 + $0x1e0] sm:$0xf] %v1417
        %1546 = vst [vmem:[%s164 + $0x1e4] sm:$0xf] %v1418
        %1547 = vst [vmem:[%s164 + $0x1e8] sm:$0xf] %v1419
        %1548 = vst [vmem:[%s164 + $0x1ec] sm:$0xf] %v1420
        %1549 = vst [vmem:[%s164 + $0x1f0] sm:$0xf] %v1421
        %1550 = vst [vmem:[%s164 + $0x1f4] sm:$0xf] %v1422
        %1551 = vst [vmem:[%s164 + $0x1f8] sm:$0xf] %v1423
        %1552 = vst [vmem:[%s164 + $0x1fc] sm:$0xf] %v1424
        %s1553 = sand.u32 %s93, 1
        %s1554 = scalar_lea.sflag [#allocation3], %s1553
        %s1555 = sand.u32 %s93, 1
        %s1556 = smul.addr %s1555, 512
        %s1557 = scalar_lea.vmem [#allocation2], %s1556
        // Predicated region
        $region33: #{fused_matmul.1} parent=31 // pred_check
          %p1558 = pneg %p103
        $region34: #{fused_matmul.1} parent=31 // pred_check_branch
          %1560 = sbr.rel (%p1558) target = $region36
        $region35: #{fused_matmul.1} parent=31 // pred_region
          %s1561 = smul.u32 128, %s17
          %1563 = vsyncadd %s1554, 0
          %s1564 = smul.addr %s1561, 4
          %s1565 = scalar_lea.hbm %s3, %s1564
          %s1566 = sshll.u32 %s1557, 4
          %s1567 = int_to_ptr.vmem [resolvable:$true] %s1566
          %s1568 = sshll.u32 %s1565, 4
          %s1569 = int_to_ptr.hbm [resolvable:$true] %s1568
          %1574 = dma.vmem_to_hbm [thread:$0]  %s1567, 8192, %s1569, %s1554, 64, 64, 4
        $region36: #{fused_matmul.1} parent=31 // pred_fallthru
          _
      $region32: #{fused_matmul.1} parent=5 // pred_fallthru
        _
      %p1575 = scmp.le.s32.totalorder 2, %s12
      // Predicated region
      $region37: #{fused_matmul.1} parent=5 // pred_check
        %p1576 = pneg %p1575
      $region38: #{fused_matmul.1} parent=5 // pred_check_branch
        %1578 = sbr.rel (%p1576) target = $region40
      $region39: #{fused_matmul.1} parent=5 // pred_region
        %s1579 = ssub.s32 %s12, 2
        // Predicated region
        $region41: #{fused_matmul.1} parent=39 // pred_check
          %p1580 = pneg %p109
        $region42: #{fused_matmul.1} parent=39 // pred_check_branch
          %1582 = sbr.rel (%p1580) target = $region44
        $region43: #{fused_matmul.1} parent=39 // pred_region
          %s1583 = sand.u32 %s94, 1
          %s1584 = scalar_lea.sflag [#allocation3], %s1583
          %s1585 = sand.u32 %s94, 1
          %s1586 = smul.addr %s1585, 512
          %s1587 = scalar_lea.vmem [#allocation2], %s1586
          %1589 = dma.done %s1584, 8192
        $region44: #{fused_matmul.1} parent=39 // pred_fallthru
          _
      $region40: #{fused_matmul.1} parent=5 // pred_fallthru
        _
    $region6: #{fused_matmul.1} parent=1 // loop_footer
      %s16 = sadd.s32 1, %s12
    $region7: #{fused_matmul.1} parent=1 // loop_footer_branch
      %11 = sbr.rel target = $region3
    $region8: #{fused_matmul.1} parent=1 // loop_exit
      _
    %1590 = vsyncpa [#allocation3], 1
    %s1591 = scalar_lea.sflag [#allocation3], 1
    %1592 = vsyncpa %s1591, 1

</llo_original>
